<compile_context>
chip_gen: v6e
topology: v6e:2x2x1
jax: 0.10.0
libtpu: 0.0.40
codegen_flags: <defaults>
</compile_context>

<pallas_src>
import functools
import numpy as np
import jax
import jax.numpy as jnp
from jax import lax
from jax.experimental import pallas as pl
from jax.experimental.pallas import tpu as pltpu


# --------------------------------------------------------------------------
# DFT matrices (ortho-normalized), used as plain MXU matmuls.
# --------------------------------------------------------------------------
def _dft_mats(length):
    """Ortho rDFT / irDFT matrices: Re = x @ cos_t, Im = x @ sin_t,
    irfft = Re @ icos_t + Im @ isin_t (imag of DC/Nyquist bins is ignored,
    matching torch.fft.irfft)."""
    freqs = length // 2 + 1
    n = np.arange(length)[:, None].astype(np.float64)
    k = np.arange(freqs)[None, :].astype(np.float64)
    ang = 2.0 * np.pi * n * k / length
    scale = 1.0 / np.sqrt(length)
    cos_t = scale * np.cos(ang)                 # (L, F)
    sin_t = -scale * np.sin(ang)                # (L, F)
    w = np.full((freqs, 1), 2.0)                # Hermitian-symmetry weights
    w[0, 0] = 1.0
    if length % 2 == 0:
        w[-1, 0] = 1.0
    icos_t = (scale * w) * np.cos(ang.T)        # (F, L)
    isin_t = -(scale * w) * np.sin(ang.T)       # (F, L)
    return tuple(jnp.asarray(m, jnp.float32) for m in (cos_t, sin_t, icos_t, isin_t))


def _gelu(v):
    # exact (erf-based) GELU, matching torch.nn.GELU() default.  erf/rsqrt go
    # to the EUP slot, effectively free once the MXU is the binding unit.
    return 0.5 * v * (1.0 + lax.erf(v * 0.7071067811865476))


def _inorm(v, eps=1e-5):
    # InstanceNorm1d (no affine): per-row normalization over the lane axis.
    m = jnp.mean(v, axis=-1, keepdims=True)
    d = v - m
    var = jnp.mean(d * d, axis=-1, keepdims=True)
    return d * lax.rsqrt(var + eps)


# --------------------------------------------------------------------------
# Kernel
# --------------------------------------------------------------------------
def _ffc_kernel(xl_ref, xg_ref,
                w_l_ref, w_g_ref,
                fu_wrr_ref, fu_wri_ref, fu_wir_ref, fu_wii_ref, fu_bre_ref, fu_bim_ref,
                lf_wrr_ref, lf_wri_ref, lf_wir_ref, lf_wii_ref, lf_bre_ref, lf_bim_ref,
                s1_ref, s2_ref, w_c2_ref,
                cos_l_ref, sin_l_ref, icos_l_ref, isin_l_ref,
                cos_s_ref, sin_s_ref, icos_s_ref, isin_s_ref,
                out_l_ref, out_g_ref,
                *, bt, out_cl, half, mxu_dtype):
    def dot(a, b):
        return jnp.dot(a.astype(mxu_dtype), b.astype(mxu_dtype),
                       preferred_element_type=jnp.float32)

    n_loc = bt * out_cl

    # ---- fused 1x1 convolutions (block-diagonal over the batch tile) ------
    #   w_l = [kron(I, w_l2l); kron(I, w_l2g)]   applied to the local half
    #   w_g = [kron(I, w_g2l); kron(I, w_c1)]    applied to the global half
    yl = dot(w_l_ref[...], xl_ref[...])          # (bt*(out_cl+out_cg), L)
    yg = dot(w_g_ref[...], xg_ref[...])          # (bt*(out_cl+c),      L)

    out_l_ref[...] = yl[:n_loc] + yg[:n_loc]     # convl2l(x_l) + convg2l(x_g)
    l2g = yl[n_loc:]                             # convl2g(x_l)      (bt*out_cg, L)
    h = _gelu(_inorm(yg[n_loc:]))                # conv1 -> IN -> GELU (bt*c, L)

    # ---- FourierUnit: rfft -> 1x1 conv -> IN -> GELU -> irfft -------------
    # conv_fft weights are pre-split into real/imag quadrants (block-diagonal
    # across the batch tile), so no channel concat / chunk is needed.
    def fourier_unit(v, wrr, wri, wir, wii, bre, bim, cos_t, sin_t, icos_t, isin_t):
        re = dot(v, cos_t)                       # rfft (ortho), real part
        im = dot(v, sin_t)                       # rfft (ortho), imag part
        y_re = dot(wrr, re) + dot(wri, im) + bre  # conv_fft, real-out channels
        y_im = dot(wir, re) + dot(wii, im) + bim  # conv_fft, imag-out channels
        y_re = _gelu(_inorm(y_re))               # InstanceNorm is per channel,
        y_im = _gelu(_inorm(y_im))               # so the real/imag split is exact
        return dot(y_re, icos_t) + dot(y_im, isin_t)   # irfft (ortho)

    fu_out = fourier_unit(h,
                          fu_wrr_ref[...], fu_wri_ref[...],
                          fu_wir_ref[...], fu_wii_ref[...],
                          fu_bre_ref[...], fu_bim_ref[...],
                          cos_l_ref[...], sin_l_ref[...],
                          icos_l_ref[...], isin_l_ref[...])

    # ---- LFU branch: first c//2 channels, length split in half and stacked
    # on channels.  The gather is expressed as two 0/1 selection matmuls (MXU)
    # instead of sublane concatenates; the trailing `.repeat(1, 1, 2)` is
    # folded into the (column-tiled) inverse-DFT matrices.
    xs_in = dot(s1_ref[...], h[:, :half]) + dot(s2_ref[...], h[:, half:])
    xs = fourier_unit(xs_in,
                      lf_wrr_ref[...], lf_wri_ref[...],
                      lf_wir_ref[...], lf_wii_ref[...],
                      lf_bre_ref[...], lf_bim_ref[...],
                      cos_s_ref[...], sin_s_ref[...],
                      icos_s_ref[...], isin_s_ref[...])       # already (bt*c, L)

    # ---- conv2 (bias=False) + global residual ------------------------------
    spec = dot(w_c2_ref[...], h + fu_out + xs)   # (bt*out_cg, L)
    out_g_ref[...] = l2g + spec


# --------------------------------------------------------------------------
# Wrapper
# --------------------------------------------------------------------------
def _pick_block_batch(n, row_sizes, c):
    """Largest batch tile bt such that bt | n, every input/output block row
    count is 8-aligned (or the block spans the full batch), the DFT-matmul M
    dimension (bt*c) stays near 128, and — when possible — the grid keeps at
    least 2 steps so the parallel batch axis can shard across TensorCores."""
    target = max(1, 128 // max(c, 1))
    candidates = []
    for bt in range(1, n + 1):
        if n % bt:
            continue
        if bt == n or all((bt * r) % 8 == 0 for r in row_sizes):
            candidates.append(bt)
    best = None
    for bt in candidates:
        if bt <= target and n // bt >= 2:
            best = bt
    if best is None:
        best = candidates[-1]
    return best


def ffc_forward(x, params, *, block_batch=None, mxu_dtype=jnp.float32):
    n, c_in, length = x.shape
    w_l2l, w_g2l, w_l2g = params["w_l2l"], params["w_g2l"], params["w_l2g"]
    w_c1, w_fu, b_fu = params["w_c1"], params["w_fu"], params["b_fu"]
    w_lfu, b_lfu, w_c2 = params["w_lfu"], params["b_lfu"], params["w_c2"]

    out_cl, in_cl = w_l2l.shape
    out_cg, in_cg = w_l2g.shape[0], w_g2l.shape[1]
    c = w_c1.shape[0]
    assert in_cl + in_cg == c_in
    assert min(in_cl, in_cg, out_cl, out_cg, c) > 0, "all channel splits must be > 0"
    assert length % 2 == 0 and c % 2 == 0
    half = length // 2
    md = mxu_dtype

    bt = block_batch if block_batch is not None else _pick_block_batch(
        n, (in_cl, in_cg, out_cl, out_cg), c)
    assert n % bt == 0
    grid = (n // bt,)

    # ---- host/XLA-side weight preprocessing (once per call, outside kernel) --
    eye = jnp.eye(bt, dtype=jnp.float32)
    kron = lambda w: jnp.kron(eye, w)            # block-diagonal over batch tile

    w_l = jnp.concatenate([kron(w_l2l), kron(w_l2g)], axis=0).astype(md)
    w_g = jnp.concatenate([kron(w_g2l), kron(w_c1)], axis=0).astype(md)
    w_c2_bd = kron(w_c2).astype(md)

    def split_conv_fft(w, b):
        wrr = kron(w[:c, :c]).astype(md)         # real-out <- real-in
        wri = kron(w[:c, c:]).astype(md)         # real-out <- imag-in
        wir = kron(w[c:, :c]).astype(md)         # imag-out <- real-in
        wii = kron(w[c:, c:]).astype(md)         # imag-out <- imag-in
        bre = jnp.tile(b[:c], (bt, 1)).astype(jnp.float32)
        bim = jnp.tile(b[c:], (bt, 1)).astype(jnp.float32)
        return wrr, wri, wir, wii, bre, bim

    fu_parts = split_conv_fft(w_fu, b_fu)
    lfu_parts = split_conv_fft(w_lfu, b_lfu)

    # 0/1 selection matrices implementing the LFU gather (first c//2 channels,
    # split the length in half, stack on channels) without in-kernel concats.
    c2 = c // 2
    s1_np = np.zeros((bt * c, bt * c), np.float32)
    s2_np = np.zeros((bt * c, bt * c), np.float32)
    for b in range(bt):
        for j in range(c2):
            s1_np[b * c + j, b * c + j] = 1.0            # first length half
            s2_np[b * c + c2 + j, b * c + j] = 1.0       # second length half
    s1 = jnp.asarray(s1_np, md)
    s2 = jnp.asarray(s2_np, md)

    cos_l = params["cos_l"].astype(md)
    sin_l = params["sin_l"].astype(md)
    icos_l = params["icos_l"].astype(md)
    isin_l = params["isin_l"].astype(md)
    cos_s = params["cos_s"].astype(md)
    sin_s = params["sin_s"].astype(md)
    # fold the trailing `.repeat(1, 1, 2)` of the LFU into its inverse DFT.
    icos_s = jnp.tile(params["icos_s"], (1, 2)).astype(md)
    isin_s = jnp.tile(params["isin_s"], (1, 2)).astype(md)

    weights = [w_l, w_g, *fu_parts, *lfu_parts, s1, s2, w_c2_bd,
               cos_l, sin_l, icos_l, isin_l, cos_s, sin_s, icos_s, isin_s]

    # ---- inputs: split local/global halves and flatten (batch, chan) -> rows.
    # These reshapes are free metadata changes at the XLA level.
    x = x.astype(jnp.float32)
    x_l = x[:, :in_cl, :].reshape(n * in_cl, length)
    x_g = x[:, in_cl:, :].reshape(n * in_cg, length)

    def full_spec(a):
        # grid-invariant operand: one block == the whole array.
        return pl.BlockSpec(a.shape, lambda i, _nd=a.ndim: (0,) * _nd)

    in_specs = [pl.BlockSpec((bt * in_cl, length), lambda i: (i, 0)),
                pl.BlockSpec((bt * in_cg, length), lambda i: (i, 0))]
    in_specs += [full_spec(w) for w in weights]
    out_specs = (pl.BlockSpec((bt * out_cl, length), lambda i: (i, 0)),
                 pl.BlockSpec((bt * out_cg, length), lambda i: (i, 0)))
    out_shape = (jax.ShapeDtypeStruct((n * out_cl, length), jnp.float32),
                 jax.ShapeDtypeStruct((n * out_cg, length), jnp.float32))

    kernel = functools.partial(_ffc_kernel, bt=bt, out_cl=out_cl, half=half,
                               mxu_dtype=md)

    # Raise the scoped-VMEM budget above the per-chip defaults (16/32 MiB) but
    # stay safely below v7x's 64 MiB physical VMEM.
    weight_bytes = sum(int(w.size) * w.dtype.itemsize for w in weights)
    io_bytes = 4 * length * bt * (in_cl + in_cg + out_cl + out_cg) * 2  # dbl-buffer
    vmem_limit = int(min(48 << 20, max(32 << 20, 2 * (weight_bytes + io_bytes))))

    out_l, out_g = pl.pallas_call(
        kernel,
        out_shape=out_shape,
        grid=grid,
        in_specs=in_specs,
        out_specs=out_specs,
        compiler_params=pltpu.CompilerParams(
            dimension_semantics=("parallel",),
            vmem_limit_bytes=vmem_limit),
    )(x_l, x_g, *weights)

    out_l = out_l.reshape(n, out_cl, length)
    out_g = out_g.reshape(n, out_cg, length)
    return jnp.concatenate([out_l, out_g], axis=1)


# --------------------------------------------------------------------------
# Parameter init (matches torch Conv1d defaults; kernel_size=1, bias per spec)
# --------------------------------------------------------------------------
def init_ffc_params(key, in_channels, out_channels, length,
                    ratio_gin=0.5, ratio_gout=0.5):
    in_cg = int(in_channels * ratio_gin)
    in_cl = in_channels - in_cg
    out_cg = int(out_channels * ratio_gout)
    out_cl = out_channels - out_cg
    c = out_cg // 2                      # SpectralTransform hidden channels

    keys = jax.random.split(key, 9)

    def uni(k, shape, fan_in):
        bound = 1.0 / np.sqrt(fan_in)
        return jax.random.uniform(k, shape, jnp.float32, -bound, bound)

    params = {
        "w_l2l": uni(keys[0], (out_cl, in_cl), in_cl),      # convl2l (k=1, no bias)
        "w_g2l": uni(keys[1], (out_cl, in_cg), in_cg),      # convg2l
        "w_l2g": uni(keys[2], (out_cg, in_cl), in_cl),      # convl2g
        "w_c1":  uni(keys[3], (c, in_cg), in_cg),           # SpectralTransform.conv1
        "w_fu":  uni(keys[4], (2 * c, 2 * c), 2 * c),       # fu.conv_fft weight
        "b_fu":  uni(keys[5], (2 * c, 1), 2 * c),           # fu.conv_fft bias
        "w_lfu": uni(keys[6], (2 * c, 2 * c), 2 * c),       # lfu.conv_fft weight
        "b_lfu": uni(keys[7], (2 * c, 1), 2 * c),           # lfu.conv_fft bias
        "w_c2":  uni(keys[8], (out_cg, c), c),              # SpectralTransform.conv2
    }
    cos_l, sin_l, icos_l, isin_l = _dft_mats(length)        # FU: full length
    cos_s, sin_s, icos_s, isin_s = _dft_mats(length // 2)   # LFU: half length
    params.update(cos_l=cos_l, sin_l=sin_l, icos_l=icos_l, isin_l=isin_l,
                  cos_s=cos_s, sin_s=sin_s, icos_s=icos_s, isin_s=isin_s)
    return params


# --------------------------------------------------------------------------
# Pure-JAX reference (same dense-DFT formulation) for self-checking.
# --------------------------------------------------------------------------
def _ffc_reference(x, params):
    out_cl, in_cl = params["w_l2l"].shape
    c = params["w_c1"].shape[0]
    x_l, x_g = x[:, :in_cl], x[:, in_cl:]
    conv = lambda w, v: jnp.einsum("oi,bil->bol", w, v)
    gelu = lambda v: 0.5 * v * (1.0 + lax.erf(v * 0.7071067811865476))

    def inorm(v, eps=1e-5):
        m = v.mean(-1, keepdims=True)
        d = v - m
        return d * lax.rsqrt((d * d).mean(-1, keepdims=True) + eps)

    def fourier_unit(v, w, b, cos_t, sin_t, icos_t, isin_t):
        re = jnp.einsum("bcl,lf->bcf", v, cos_t)
        im = jnp.einsum("bcl,lf->bcf", v, sin_t)
        xf = jnp.concatenate([re, im], axis=1)
        y = gelu(inorm(conv(w, xf) + b[None]))
        cv = v.shape[1]
        return (jnp.einsum("bcf,fl->bcl", y[:, :cv], icos_t)
                + jnp.einsum("bcf,fl->bcl", y[:, cv:], isin_t))

    out_xl = conv(params["w_l2l"], x_l) + conv(params["w_g2l"], x_g)
    l2g = conv(params["w_l2g"], x_l)
    h = gelu(inorm(conv(params["w_c1"], x_g)))
    fu = fourier_unit(h, params["w_fu"], params["b_fu"],
                      params["cos_l"], params["sin_l"],
                      params["icos_l"], params["isin_l"])
    c2, half = c // 2, x.shape[-1] // 2
    xs_in = jnp.concatenate([h[:, :c2, :half], h[:, :c2, half:]], axis=1)
    xs = fourier_unit(xs_in, params["w_lfu"], params["b_lfu"],
                      params["cos_s"], params["sin_s"],
                      params["icos_s"], params["isin_s"])
    xs = jnp.concatenate([xs, xs], axis=-1)
    out_xg = l2g + jnp.einsum("oi,bil->bol", params["w_c2"], h + fu + xs)
    return jnp.concatenate([out_xl, out_xg], axis=1)


if __name__ == "__main__":
    # FFC(in_channels=4, out_channels=8, kernel_size=1) on x of shape (2, 4, 16)
    key = jax.random.PRNGKey(0)
    k_x, k_p = jax.random.split(key)
    x = jax.random.normal(k_x, (2, 4, 16), jnp.float32)
    params = init_ffc_params(k_p, in_channels=4, out_channels=8, length=16)

    out = ffc_forward(x, params)
    jax.block_until_ready(out)
    assert out.shape == (2, 8, 16), out.shape

    ref = _ffc_reference(x, params)
    np.testing.assert_allclose(np.asarray(out), np.asarray(ref),
                               rtol=1e-4, atol=1e-4)
    print("KERNEL_OK")
</pallas_src>

<mosaic_0001>
module attributes {stable_mosaic.version = 11 : i64} {
  func.func @_ffc_kernel(%arg0: i32, %arg1: memref<4x16xf32, #tpu.memory_space<vmem>>, %arg2: memref<4x16xf32, #tpu.memory_space<vmem>>, %arg3: memref<16x4xf32, #tpu.memory_space<vmem>>, %arg4: memref<12x4xf32, #tpu.memory_space<vmem>>, %arg5: memref<4x4xf32, #tpu.memory_space<vmem>>, %arg6: memref<4x4xf32, #tpu.memory_space<vmem>>, %arg7: memref<4x4xf32, #tpu.memory_space<vmem>>, %arg8: memref<4x4xf32, #tpu.memory_space<vmem>>, %arg9: memref<4x1xf32, #tpu.memory_space<vmem>>, %arg10: memref<4x1xf32, #tpu.memory_space<vmem>>, %arg11: memref<4x4xf32, #tpu.memory_space<vmem>>, %arg12: memref<4x4xf32, #tpu.memory_space<vmem>>, %arg13: memref<4x4xf32, #tpu.memory_space<vmem>>, %arg14: memref<4x4xf32, #tpu.memory_space<vmem>>, %arg15: memref<4x1xf32, #tpu.memory_space<vmem>>, %arg16: memref<4x1xf32, #tpu.memory_space<vmem>>, %arg17: memref<4x4xf32, #tpu.memory_space<vmem>>, %arg18: memref<4x4xf32, #tpu.memory_space<vmem>>, %arg19: memref<8x4xf32, #tpu.memory_space<vmem>>, %arg20: memref<16x9xf32, #tpu.memory_space<vmem>>, %arg21: memref<16x9xf32, #tpu.memory_space<vmem>>, %arg22: memref<9x16xf32, #tpu.memory_space<vmem>>, %arg23: memref<9x16xf32, #tpu.memory_space<vmem>>, %arg24: memref<8x5xf32, #tpu.memory_space<vmem>>, %arg25: memref<8x5xf32, #tpu.memory_space<vmem>>, %arg26: memref<5x16xf32, #tpu.memory_space<vmem>>, %arg27: memref<5x16xf32, #tpu.memory_space<vmem>>, %arg28: memref<8x16xf32, #tpu.memory_space<vmem>>, %arg29: memref<8x16xf32, #tpu.memory_space<vmem>>) attributes {dimension_semantics = [#tpu.dimension_semantics<parallel>], iteration_bounds = array<i64: 1>, scalar_prefetch = 0 : i64, scratch_operands = 0 : i64, tpu.core_type = #tpu.core_type<tc>, window_params = [{transform_indices = @transform_0, window_bounds = array<i64: 4, 16>}, {transform_indices = @transform_1, window_bounds = array<i64: 4, 16>}, {pipeline_mode = #tpu.pipeline_mode<synchronous>, transform_indices = @transform_2, window_bounds = array<i64: 16, 4>}, {pipeline_mode = #tpu.pipeline_mode<synchronous>, transform_indices = @transform_3, window_bounds = array<i64: 12, 4>}, {pipeline_mode = #tpu.pipeline_mode<synchronous>, transform_indices = @transform_4, window_bounds = array<i64: 4, 4>}, {pipeline_mode = #tpu.pipeline_mode<synchronous>, transform_indices = @transform_5, window_bounds = array<i64: 4, 4>}, {pipeline_mode = #tpu.pipeline_mode<synchronous>, transform_indices = @transform_6, window_bounds = array<i64: 4, 4>}, {pipeline_mode = #tpu.pipeline_mode<synchronous>, transform_indices = @transform_7, window_bounds = array<i64: 4, 4>}, {pipeline_mode = #tpu.pipeline_mode<synchronous>, transform_indices = @transform_8, window_bounds = array<i64: 4, 1>}, {pipeline_mode = #tpu.pipeline_mode<synchronous>, transform_indices = @transform_9, window_bounds = array<i64: 4, 1>}, {pipeline_mode = #tpu.pipeline_mode<synchronous>, transform_indices = @transform_10, window_bounds = array<i64: 4, 4>}, {pipeline_mode = #tpu.pipeline_mode<synchronous>, transform_indices = @transform_11, window_bounds = array<i64: 4, 4>}, {pipeline_mode = #tpu.pipeline_mode<synchronous>, transform_indices = @transform_12, window_bounds = array<i64: 4, 4>}, {pipeline_mode = #tpu.pipeline_mode<synchronous>, transform_indices = @transform_13, window_bounds = array<i64: 4, 4>}, {pipeline_mode = #tpu.pipeline_mode<synchronous>, transform_indices = @transform_14, window_bounds = array<i64: 4, 1>}, {pipeline_mode = #tpu.pipeline_mode<synchronous>, transform_indices = @transform_15, window_bounds = array<i64: 4, 1>}, {pipeline_mode = #tpu.pipeline_mode<synchronous>, transform_indices = @transform_16, window_bounds = array<i64: 4, 4>}, {pipeline_mode = #tpu.pipeline_mode<synchronous>, transform_indices = @transform_17, window_bounds = array<i64: 4, 4>}, {pipeline_mode = #tpu.pipeline_mode<synchronous>, transform_indices = @transform_18, window_bounds = array<i64: 8, 4>}, {pipeline_mode = #tpu.pipeline_mode<synchronous>, transform_indices = @transform_19, window_bounds = array<i64: 16, 9>}, {pipeline_mode = #tpu.pipeline_mode<synchronous>, transform_indices = @transform_20, window_bounds = array<i64: 16, 9>}, {pipeline_mode = #tpu.pipeline_mode<synchronous>, transform_indices = @transform_21, window_bounds = array<i64: 9, 16>}, {pipeline_mode = #tpu.pipeline_mode<synchronous>, transform_indices = @transform_22, window_bounds = array<i64: 9, 16>}, {pipeline_mode = #tpu.pipeline_mode<synchronous>, transform_indices = @transform_23, window_bounds = array<i64: 8, 5>}, {pipeline_mode = #tpu.pipeline_mode<synchronous>, transform_indices = @transform_24, window_bounds = array<i64: 8, 5>}, {pipeline_mode = #tpu.pipeline_mode<synchronous>, transform_indices = @transform_25, window_bounds = array<i64: 5, 16>}, {pipeline_mode = #tpu.pipeline_mode<synchronous>, transform_indices = @transform_26, window_bounds = array<i64: 5, 16>}, {transform_indices = @transform_27, window_bounds = array<i64: 8, 16>}, {transform_indices = @transform_28, window_bounds = array<i64: 8, 16>}]} {
    %c0 = arith.constant 0 : index
    %c0_0 = arith.constant 0 : index
    %0 = vector.load %arg3[%c0, %c0_0] : memref<16x4xf32, #tpu.memory_space<vmem>>, vector<16x4xf32>
    %c0_1 = arith.constant 0 : index
    %c0_2 = arith.constant 0 : index
    %1 = vector.load %arg1[%c0_1, %c0_2] : memref<4x16xf32, #tpu.memory_space<vmem>>, vector<4x16xf32>
    %cst = arith.constant dense<0.000000e+00> : vector<16x16xf32>
    %2 = tpu.matmul %0, %1, %cst {dimension_numbers = #tpu.dot_dimension_numbers<[1], [0], [0], [1], [0, 0, 1, 1], [], []>} : vector<16x4xf32>, vector<4x16xf32>, vector<16x16xf32> -> vector<16x16xf32>
    %c0_3 = arith.constant 0 : index
    %c0_4 = arith.constant 0 : index
    %3 = vector.load %arg4[%c0_3, %c0_4] : memref<12x4xf32, #tpu.memory_space<vmem>>, vector<12x4xf32>
    %c0_5 = arith.constant 0 : index
    %c0_6 = arith.constant 0 : index
    %4 = vector.load %arg2[%c0_5, %c0_6] : memref<4x16xf32, #tpu.memory_space<vmem>>, vector<4x16xf32>
    %cst_7 = arith.constant dense<0.000000e+00> : vector<12x16xf32>
    %5 = tpu.matmul %3, %4, %cst_7 {dimension_numbers = #tpu.dot_dimension_numbers<[1], [0], [0], [1], [0, 0, 1, 1], [], []>} : vector<12x4xf32>, vector<4x16xf32>, vector<12x16xf32> -> vector<12x16xf32>
    %6 = vector.extract_strided_slice %2 {offsets = [0, 0], sizes = [8, 16], strides = [1, 1]} : vector<16x16xf32> to vector<8x16xf32>
    %7 = vector.extract_strided_slice %5 {offsets = [0, 0], sizes = [8, 16], strides = [1, 1]} : vector<12x16xf32> to vector<8x16xf32>
    %8 = arith.addf %6, %7 : vector<8x16xf32>
    %c0_8 = arith.constant 0 : index
    %c0_9 = arith.constant 0 : index
    %9 = vector.load %arg28[%c0_8, %c0_9] : memref<8x16xf32, #tpu.memory_space<vmem>>, vector<8x16xf32>
    tpu.vector_store %arg28[%c0_8, %c0_9], %8 {strides = array<i32>} : memref<8x16xf32, #tpu.memory_space<vmem>>, vector<8x16xf32>,
    %10 = vector.extract_strided_slice %2 {offsets = [8, 0], sizes = [8, 16], strides = [1, 1]} : vector<16x16xf32> to vector<8x16xf32>
    %11 = vector.extract_strided_slice %5 {offsets = [8, 0], sizes = [4, 16], strides = [1, 1]} : vector<12x16xf32> to vector<4x16xf32>
    %cst_10 = arith.constant dense<0.000000e+00> : vector<4xf32>
    %12 = vector.multi_reduction <add>, %11, %cst_10 [1] : vector<4x16xf32> to vector<4xf32>
    %13 = vector.shape_cast %12 : vector<4xf32> to vector<4x1xf32>
    %cst_11 = arith.constant 1.600000e+01 : f32
    %14 = vector.broadcast %cst_11 : f32 to vector<4x1xf32>
    %15 = arith.divf %13, %14 : vector<4x1xf32>
    %16 = vector.broadcast %15 : vector<4x1xf32> to vector<4x16xf32>
    %17 = arith.subf %11, %16 : vector<4x16xf32>
    %18 = arith.mulf %17, %17 : vector<4x16xf32>
    %cst_12 = arith.constant dense<0.000000e+00> : vector<4xf32>
    %19 = vector.multi_reduction <add>, %18, %cst_12 [1] : vector<4x16xf32> to vector<4xf32>
    %20 = vector.shape_cast %19 : vector<4xf32> to vector<4x1xf32>
    %cst_13 = arith.constant 1.600000e+01 : f32
    %21 = vector.broadcast %cst_13 : f32 to vector<4x1xf32>
    %22 = arith.divf %20, %21 : vector<4x1xf32>
    %cst_14 = arith.constant 9.99999974E-6 : f32
    %23 = vector.broadcast %cst_14 : f32 to vector<4x1xf32>
    %24 = arith.addf %22, %23 : vector<4x1xf32>
    %25 = math.rsqrt %24 : vector<4x1xf32>
    %26 = vector.broadcast %25 : vector<4x1xf32> to vector<4x16xf32>
    %27 = arith.mulf %17, %26 : vector<4x16xf32>
    %cst_15 = arith.constant 5.000000e-01 : f32
    %28 = vector.broadcast %cst_15 : f32 to vector<4x16xf32>
    %29 = arith.mulf %28, %27 : vector<4x16xf32>
    %cst_16 = arith.constant 0.707106769 : f32
    %30 = vector.broadcast %cst_16 : f32 to vector<4x16xf32>
    %31 = arith.mulf %27, %30 : vector<4x16xf32>
    %32 = math.erf %31 : vector<4x16xf32>
    %cst_17 = arith.constant 1.000000e+00 : f32
    %33 = vector.broadcast %cst_17 : f32 to vector<4x16xf32>
    %34 = arith.addf %33, %32 : vector<4x16xf32>
    %35 = arith.mulf %29, %34 : vector<4x16xf32>
    %c0_18 = arith.constant 0 : index
    %c0_19 = arith.constant 0 : index
    %36 = vector.load %arg5[%c0_18, %c0_19] : memref<4x4xf32, #tpu.memory_space<vmem>>, vector<4x4xf32>
    %c0_20 = arith.constant 0 : index
    %c0_21 = arith.constant 0 : index
    %37 = vector.load %arg6[%c0_20, %c0_21] : memref<4x4xf32, #tpu.memory_space<vmem>>, vector<4x4xf32>
    %c0_22 = arith.constant 0 : index
    %c0_23 = arith.constant 0 : index
    %38 = vector.load %arg7[%c0_22, %c0_23] : memref<4x4xf32, #tpu.memory_space<vmem>>, vector<4x4xf32>
    %c0_24 = arith.constant 0 : index
    %c0_25 = arith.constant 0 : index
    %39 = vector.load %arg8[%c0_24, %c0_25] : memref<4x4xf32, #tpu.memory_space<vmem>>, vector<4x4xf32>
    %c0_26 = arith.constant 0 : index
    %c0_27 = arith.constant 0 : index
    %40 = vector.load %arg9[%c0_26, %c0_27] : memref<4x1xf32, #tpu.memory_space<vmem>>, vector<4x1xf32>
    %c0_28 = arith.constant 0 : index
    %c0_29 = arith.constant 0 : index
    %41 = vector.load %arg10[%c0_28, %c0_29] : memref<4x1xf32, #tpu.memory_space<vmem>>, vector<4x1xf32>
    %c0_30 = arith.constant 0 : index
    %c0_31 = arith.constant 0 : index
    %42 = vector.load %arg20[%c0_30, %c0_31] : memref<16x9xf32, #tpu.memory_space<vmem>>, vector<16x9xf32>
    %c0_32 = arith.constant 0 : index
    %c0_33 = arith.constant 0 : index
    %43 = vector.load %arg21[%c0_32, %c0_33] : memref<16x9xf32, #tpu.memory_space<vmem>>, vector<16x9xf32>
    %c0_34 = arith.constant 0 : index
    %c0_35 = arith.constant 0 : index
    %44 = vector.load %arg22[%c0_34, %c0_35] : memref<9x16xf32, #tpu.memory_space<vmem>>, vector<9x16xf32>
    %c0_36 = arith.constant 0 : index
    %c0_37 = arith.constant 0 : index
    %45 = vector.load %arg23[%c0_36, %c0_37] : memref<9x16xf32, #tpu.memory_space<vmem>>, vector<9x16xf32>
    %cst_38 = arith.constant dense<0.000000e+00> : vector<4x9xf32>
    %46 = tpu.matmul %35, %42, %cst_38 {dimension_numbers = #tpu.dot_dimension_numbers<[1], [0], [0], [1], [0, 0, 1, 1], [], []>} : vector<4x16xf32>, vector<16x9xf32>, vector<4x9xf32> -> vector<4x9xf32>
    %cst_39 = arith.constant dense<0.000000e+00> : vector<4x9xf32>
    %47 = tpu.matmul %35, %43, %cst_39 {dimension_numbers = #tpu.dot_dimension_numbers<[1], [0], [0], [1], [0, 0, 1, 1], [], []>} : vector<4x16xf32>, vector<16x9xf32>, vector<4x9xf32> -> vector<4x9xf32>
    %cst_40 = arith.constant dense<0.000000e+00> : vector<4x9xf32>
    %48 = tpu.matmul %36, %46, %cst_40 {dimension_numbers = #tpu.dot_dimension_numbers<[1], [0], [0], [1], [0, 0, 1, 1], [], []>} : vector<4x4xf32>, vector<4x9xf32>, vector<4x9xf32> -> vector<4x9xf32>
    %cst_41 = arith.constant dense<0.000000e+00> : vector<4x9xf32>
    %49 = tpu.matmul %37, %47, %cst_41 {dimension_numbers = #tpu.dot_dimension_numbers<[1], [0], [0], [1], [0, 0, 1, 1], [], []>} : vector<4x4xf32>, vector<4x9xf32>, vector<4x9xf32> -> vector<4x9xf32>
    %50 = arith.addf %48, %49 : vector<4x9xf32>
    %51 = vector.broadcast %40 : vector<4x1xf32> to vector<4x9xf32>
    %52 = arith.addf %50, %51 : vector<4x9xf32>
    %cst_42 = arith.constant dense<0.000000e+00> : vector<4x9xf32>
    %53 = tpu.matmul %38, %46, %cst_42 {dimension_numbers = #tpu.dot_dimension_numbers<[1], [0], [0], [1], [0, 0, 1, 1], [], []>} : vector<4x4xf32>, vector<4x9xf32>, vector<4x9xf32> -> vector<4x9xf32>
    %cst_43 = arith.constant dense<0.000000e+00> : vector<4x9xf32>
    %54 = tpu.matmul %39, %47, %cst_43 {dimension_numbers = #tpu.dot_dimension_numbers<[1], [0], [0], [1], [0, 0, 1, 1], [], []>} : vector<4x4xf32>, vector<4x9xf32>, vector<4x9xf32> -> vector<4x9xf32>
    %55 = arith.addf %53, %54 : vector<4x9xf32>
    %56 = vector.broadcast %41 : vector<4x1xf32> to vector<4x9xf32>
    %57 = arith.addf %55, %56 : vector<4x9xf32>
    %cst_44 = arith.constant dense<0.000000e+00> : vector<4xf32>
    %58 = vector.multi_reduction <add>, %52, %cst_44 [1] : vector<4x9xf32> to vector<4xf32>
    %59 = vector.shape_cast %58 : vector<4xf32> to vector<4x1xf32>
    %cst_45 = arith.constant 9.000000e+00 : f32
    %60 = vector.broadcast %cst_45 : f32 to vector<4x1xf32>
    %61 = arith.divf %59, %60 : vector<4x1xf32>
    %62 = vector.broadcast %61 : vector<4x1xf32> to vector<4x9xf32>
    %63 = arith.subf %52, %62 : vector<4x9xf32>
    %64 = arith.mulf %63, %63 : vector<4x9xf32>
    %cst_46 = arith.constant dense<0.000000e+00> : vector<4xf32>
    %65 = vector.multi_reduction <add>, %64, %cst_46 [1] : vector<4x9xf32> to vector<4xf32>
    %66 = vector.shape_cast %65 : vector<4xf32> to vector<4x1xf32>
    %cst_47 = arith.constant 9.000000e+00 : f32
    %67 = vector.broadcast %cst_47 : f32 to vector<4x1xf32>
    %68 = arith.divf %66, %67 : vector<4x1xf32>
    %cst_48 = arith.constant 9.99999974E-6 : f32
    %69 = vector.broadcast %cst_48 : f32 to vector<4x1xf32>
    %70 = arith.addf %68, %69 : vector<4x1xf32>
    %71 = math.rsqrt %70 : vector<4x1xf32>
    %72 = vector.broadcast %71 : vector<4x1xf32> to vector<4x9xf32>
    %73 = arith.mulf %63, %72 : vector<4x9xf32>
    %cst_49 = arith.constant 5.000000e-01 : f32
    %74 = vector.broadcast %cst_49 : f32 to vector<4x9xf32>
    %75 = arith.mulf %74, %73 : vector<4x9xf32>
    %cst_50 = arith.constant 0.707106769 : f32
    %76 = vector.broadcast %cst_50 : f32 to vector<4x9xf32>
    %77 = arith.mulf %73, %76 : vector<4x9xf32>
    %78 = math.erf %77 : vector<4x9xf32>
    %cst_51 = arith.constant 1.000000e+00 : f32
    %79 = vector.broadcast %cst_51 : f32 to vector<4x9xf32>
    %80 = arith.addf %79, %78 : vector<4x9xf32>
    %81 = arith.mulf %75, %80 : vector<4x9xf32>
    %cst_52 = arith.constant dense<0.000000e+00> : vector<4xf32>
    %82 = vector.multi_reduction <add>, %57, %cst_52 [1] : vector<4x9xf32> to vector<4xf32>
    %83 = vector.shape_cast %82 : vector<4xf32> to vector<4x1xf32>
    %cst_53 = arith.constant 9.000000e+00 : f32
    %84 = vector.broadcast %cst_53 : f32 to vector<4x1xf32>
    %85 = arith.divf %83, %84 : vector<4x1xf32>
    %86 = vector.broadcast %85 : vector<4x1xf32> to vector<4x9xf32>
    %87 = arith.subf %57, %86 : vector<4x9xf32>
    %88 = arith.mulf %87, %87 : vector<4x9xf32>
    %cst_54 = arith.constant dense<0.000000e+00> : vector<4xf32>
    %89 = vector.multi_reduction <add>, %88, %cst_54 [1] : vector<4x9xf32> to vector<4xf32>
    %90 = vector.shape_cast %89 : vector<4xf32> to vector<4x1xf32>
    %cst_55 = arith.constant 9.000000e+00 : f32
    %91 = vector.broadcast %cst_55 : f32 to vector<4x1xf32>
    %92 = arith.divf %90, %91 : vector<4x1xf32>
    %cst_56 = arith.constant 9.99999974E-6 : f32
    %93 = vector.broadcast %cst_56 : f32 to vector<4x1xf32>
    %94 = arith.addf %92, %93 : vector<4x1xf32>
    %95 = math.rsqrt %94 : vector<4x1xf32>
    %96 = vector.broadcast %95 : vector<4x1xf32> to vector<4x9xf32>
    %97 = arith.mulf %87, %96 : vector<4x9xf32>
    %cst_57 = arith.constant 5.000000e-01 : f32
    %98 = vector.broadcast %cst_57 : f32 to vector<4x9xf32>
    %99 = arith.mulf %98, %97 : vector<4x9xf32>
    %cst_58 = arith.constant 0.707106769 : f32
    %100 = vector.broadcast %cst_58 : f32 to vector<4x9xf32>
    %101 = arith.mulf %97, %100 : vector<4x9xf32>
    %102 = math.erf %101 : vector<4x9xf32>
    %cst_59 = arith.constant 1.000000e+00 : f32
    %103 = vector.broadcast %cst_59 : f32 to vector<4x9xf32>
    %104 = arith.addf %103, %102 : vector<4x9xf32>
    %105 = arith.mulf %99, %104 : vector<4x9xf32>
    %cst_60 = arith.constant dense<0.000000e+00> : vector<4x16xf32>
    %106 = tpu.matmul %81, %44, %cst_60 {dimension_numbers = #tpu.dot_dimension_numbers<[1], [0], [0], [1], [0, 0, 1, 1], [], []>} : vector<4x9xf32>, vector<9x16xf32>, vector<4x16xf32> -> vector<4x16xf32>
    %cst_61 = arith.constant dense<0.000000e+00> : vector<4x16xf32>
    %107 = tpu.matmul %105, %45, %cst_61 {dimension_numbers = #tpu.dot_dimension_numbers<[1], [0], [0], [1], [0, 0, 1, 1], [], []>} : vector<4x9xf32>, vector<9x16xf32>, vector<4x16xf32> -> vector<4x16xf32>
    %108 = arith.addf %106, %107 : vector<4x16xf32>
    %c0_62 = arith.constant 0 : index
    %c0_63 = arith.constant 0 : index
    %109 = vector.load %arg17[%c0_62, %c0_63] : memref<4x4xf32, #tpu.memory_space<vmem>>, vector<4x4xf32>
    %110 = vector.extract_strided_slice %35 {offsets = [0, 0], sizes = [4, 8], strides = [1, 1]} : vector<4x16xf32> to vector<4x8xf32>
    %cst_64 = arith.constant dense<0.000000e+00> : vector<4x8xf32>
    %111 = tpu.matmul %109, %110, %cst_64 {dimension_numbers = #tpu.dot_dimension_numbers<[1], [0], [0], [1], [0, 0, 1, 1], [], []>} : vector<4x4xf32>, vector<4x8xf32>, vector<4x8xf32> -> vector<4x8xf32>
    %c0_65 = arith.constant 0 : index
    %c0_66 = arith.constant 0 : index
    %112 = vector.load %arg18[%c0_65, %c0_66] : memref<4x4xf32, #tpu.memory_space<vmem>>, vector<4x4xf32>
    %113 = vector.extract_strided_slice %35 {offsets = [0, 8], sizes = [4, 8], strides = [1, 1]} : vector<4x16xf32> to vector<4x8xf32>
    %cst_67 = arith.constant dense<0.000000e+00> : vector<4x8xf32>
    %114 = tpu.matmul %112, %113, %cst_67 {dimension_numbers = #tpu.dot_dimension_numbers<[1], [0], [0], [1], [0, 0, 1, 1], [], []>} : vector<4x4xf32>, vector<4x8xf32>, vector<4x8xf32> -> vector<4x8xf32>
    %115 = arith.addf %111, %114 : vector<4x8xf32>
    %c0_68 = arith.constant 0 : index
    %c0_69 = arith.constant 0 : index
    %116 = vector.load %arg11[%c0_68, %c0_69] : memref<4x4xf32, #tpu.memory_space<vmem>>, vector<4x4xf32>
    %c0_70 = arith.constant 0 : index
    %c0_71 = arith.constant 0 : index
    %117 = vector.load %arg12[%c0_70, %c0_71] : memref<4x4xf32, #tpu.memory_space<vmem>>, vector<4x4xf32>
    %c0_72 = arith.constant 0 : index
    %c0_73 = arith.constant 0 : index
    %118 = vector.load %arg13[%c0_72, %c0_73] : memref<4x4xf32, #tpu.memory_space<vmem>>, vector<4x4xf32>
    %c0_74 = arith.constant 0 : index
    %c0_75 = arith.constant 0 : index
    %119 = vector.load %arg14[%c0_74, %c0_75] : memref<4x4xf32, #tpu.memory_space<vmem>>, vector<4x4xf32>
    %c0_76 = arith.constant 0 : index
    %c0_77 = arith.constant 0 : index
    %120 = vector.load %arg15[%c0_76, %c0_77] : memref<4x1xf32, #tpu.memory_space<vmem>>, vector<4x1xf32>
    %c0_78 = arith.constant 0 : index
    %c0_79 = arith.constant 0 : index
    %121 = vector.load %arg16[%c0_78, %c0_79] : memref<4x1xf32, #tpu.memory_space<vmem>>, vector<4x1xf32>
    %c0_80 = arith.constant 0 : index
    %c0_81 = arith.constant 0 : index
    %122 = vector.load %arg24[%c0_80, %c0_81] : memref<8x5xf32, #tpu.memory_space<vmem>>, vector<8x5xf32>
    %c0_82 = arith.constant 0 : index
    %c0_83 = arith.constant 0 : index
    %123 = vector.load %arg25[%c0_82, %c0_83] : memref<8x5xf32, #tpu.memory_space<vmem>>, vector<8x5xf32>
    %c0_84 = arith.constant 0 : index
    %c0_85 = arith.constant 0 : index
    %124 = vector.load %arg26[%c0_84, %c0_85] : memref<5x16xf32, #tpu.memory_space<vmem>>, vector<5x16xf32>
    %c0_86 = arith.constant 0 : index
    %c0_87 = arith.constant 0 : index
    %125 = vector.load %arg27[%c0_86, %c0_87] : memref<5x16xf32, #tpu.memory_space<vmem>>, vector<5x16xf32>
    %cst_88 = arith.constant dense<0.000000e+00> : vector<4x5xf32>
    %126 = tpu.matmul %115, %122, %cst_88 {dimension_numbers = #tpu.dot_dimension_numbers<[1], [0], [0], [1], [0, 0, 1, 1], [], []>} : vector<4x8xf32>, vector<8x5xf32>, vector<4x5xf32> -> vector<4x5xf32>
    %cst_89 = arith.constant dense<0.000000e+00> : vector<4x5xf32>
    %127 = tpu.matmul %115, %123, %cst_89 {dimension_numbers = #tpu.dot_dimension_numbers<[1], [0], [0], [1], [0, 0, 1, 1], [], []>} : vector<4x8xf32>, vector<8x5xf32>, vector<4x5xf32> -> vector<4x5xf32>
    %cst_90 = arith.constant dense<0.000000e+00> : vector<4x5xf32>
    %128 = tpu.matmul %116, %126, %cst_90 {dimension_numbers = #tpu.dot_dimension_numbers<[1], [0], [0], [1], [0, 0, 1, 1], [], []>} : vector<4x4xf32>, vector<4x5xf32>, vector<4x5xf32> -> vector<4x5xf32>
    %cst_91 = arith.constant dense<0.000000e+00> : vector<4x5xf32>
    %129 = tpu.matmul %117, %127, %cst_91 {dimension_numbers = #tpu.dot_dimension_numbers<[1], [0], [0], [1], [0, 0, 1, 1], [], []>} : vector<4x4xf32>, vector<4x5xf32>, vector<4x5xf32> -> vector<4x5xf32>
    %130 = arith.addf %128, %129 : vector<4x5xf32>
    %131 = vector.broadcast %120 : vector<4x1xf32> to vector<4x5xf32>
    %132 = arith.addf %130, %131 : vector<4x5xf32>
    %cst_92 = arith.constant dense<0.000000e+00> : vector<4x5xf32>
    %133 = tpu.matmul %118, %126, %cst_92 {dimension_numbers = #tpu.dot_dimension_numbers<[1], [0], [0], [1], [0, 0, 1, 1], [], []>} : vector<4x4xf32>, vector<4x5xf32>, vector<4x5xf32> -> vector<4x5xf32>
    %cst_93 = arith.constant dense<0.000000e+00> : vector<4x5xf32>
    %134 = tpu.matmul %119, %127, %cst_93 {dimension_numbers = #tpu.dot_dimension_numbers<[1], [0], [0], [1], [0, 0, 1, 1], [], []>} : vector<4x4xf32>, vector<4x5xf32>, vector<4x5xf32> -> vector<4x5xf32>
    %135 = arith.addf %133, %134 : vector<4x5xf32>
    %136 = vector.broadcast %121 : vector<4x1xf32> to vector<4x5xf32>
    %137 = arith.addf %135, %136 : vector<4x5xf32>
    %cst_94 = arith.constant dense<0.000000e+00> : vector<4xf32>
    %138 = vector.multi_reduction <add>, %132, %cst_94 [1] : vector<4x5xf32> to vector<4xf32>
    %139 = vector.shape_cast %138 : vector<4xf32> to vector<4x1xf32>
    %cst_95 = arith.constant 5.000000e+00 : f32
    %140 = vector.broadcast %cst_95 : f32 to vector<4x1xf32>
    %141 = arith.divf %139, %140 : vector<4x1xf32>
    %142 = vector.broadcast %141 : vector<4x1xf32> to vector<4x5xf32>
    %143 = arith.subf %132, %142 : vector<4x5xf32>
    %144 = arith.mulf %143, %143 : vector<4x5xf32>
    %cst_96 = arith.constant dense<0.000000e+00> : vector<4xf32>
    %145 = vector.multi_reduction <add>, %144, %cst_96 [1] : vector<4x5xf32> to vector<4xf32>
    %146 = vector.shape_cast %145 : vector<4xf32> to vector<4x1xf32>
    %cst_97 = arith.constant 5.000000e+00 : f32
    %147 = vector.broadcast %cst_97 : f32 to vector<4x1xf32>
    %148 = arith.divf %146, %147 : vector<4x1xf32>
    %cst_98 = arith.constant 9.99999974E-6 : f32
    %149 = vector.broadcast %cst_98 : f32 to vector<4x1xf32>
    %150 = arith.addf %148, %149 : vector<4x1xf32>
    %151 = math.rsqrt %150 : vector<4x1xf32>
    %152 = vector.broadcast %151 : vector<4x1xf32> to vector<4x5xf32>
    %153 = arith.mulf %143, %152 : vector<4x5xf32>
    %cst_99 = arith.constant 5.000000e-01 : f32
    %154 = vector.broadcast %cst_99 : f32 to vector<4x5xf32>
    %155 = arith.mulf %154, %153 : vector<4x5xf32>
    %cst_100 = arith.constant 0.707106769 : f32
    %156 = vector.broadcast %cst_100 : f32 to vector<4x5xf32>
    %157 = arith.mulf %153, %156 : vector<4x5xf32>
    %158 = math.erf %157 : vector<4x5xf32>
    %cst_101 = arith.constant 1.000000e+00 : f32
    %159 = vector.broadcast %cst_101 : f32 to vector<4x5xf32>
    %160 = arith.addf %159, %158 : vector<4x5xf32>
    %161 = arith.mulf %155, %160 : vector<4x5xf32>
    %cst_102 = arith.constant dense<0.000000e+00> : vector<4xf32>
    %162 = vector.multi_reduction <add>, %137, %cst_102 [1] : vector<4x5xf32> to vector<4xf32>
    %163 = vector.shape_cast %162 : vector<4xf32> to vector<4x1xf32>
    %cst_103 = arith.constant 5.000000e+00 : f32
    %164 = vector.broadcast %cst_103 : f32 to vector<4x1xf32>
    %165 = arith.divf %163, %164 : vector<4x1xf32>
    %166 = vector.broadcast %165 : vector<4x1xf32> to vector<4x5xf32>
    %167 = arith.subf %137, %166 : vector<4x5xf32>
    %168 = arith.mulf %167, %167 : vector<4x5xf32>
    %cst_104 = arith.constant dense<0.000000e+00> : vector<4xf32>
    %169 = vector.multi_reduction <add>, %168, %cst_104 [1] : vector<4x5xf32> to vector<4xf32>
    %170 = vector.shape_cast %169 : vector<4xf32> to vector<4x1xf32>
    %cst_105 = arith.constant 5.000000e+00 : f32
    %171 = vector.broadcast %cst_105 : f32 to vector<4x1xf32>
    %172 = arith.divf %170, %171 : vector<4x1xf32>
    %cst_106 = arith.constant 9.99999974E-6 : f32
    %173 = vector.broadcast %cst_106 : f32 to vector<4x1xf32>
    %174 = arith.addf %172, %173 : vector<4x1xf32>
    %175 = math.rsqrt %174 : vector<4x1xf32>
    %176 = vector.broadcast %175 : vector<4x1xf32> to vector<4x5xf32>
    %177 = arith.mulf %167, %176 : vector<4x5xf32>
    %cst_107 = arith.constant 5.000000e-01 : f32
    %178 = vector.broadcast %cst_107 : f32 to vector<4x5xf32>
    %179 = arith.mulf %178, %177 : vector<4x5xf32>
    %cst_108 = arith.constant 0.707106769 : f32
    %180 = vector.broadcast %cst_108 : f32 to vector<4x5xf32>
    %181 = arith.mulf %177, %180 : vector<4x5xf32>
    %182 = math.erf %181 : vector<4x5xf32>
    %cst_109 = arith.constant 1.000000e+00 : f32
    %183 = vector.broadcast %cst_109 : f32 to vector<4x5xf32>
    %184 = arith.addf %183, %182 : vector<4x5xf32>
    %185 = arith.mulf %179, %184 : vector<4x5xf32>
    %cst_110 = arith.constant dense<0.000000e+00> : vector<4x16xf32>
    %186 = tpu.matmul %161, %124, %cst_110 {dimension_numbers = #tpu.dot_dimension_numbers<[1], [0], [0], [1], [0, 0, 1, 1], [], []>} : vector<4x5xf32>, vector<5x16xf32>, vector<4x16xf32> -> vector<4x16xf32>
    %cst_111 = arith.constant dense<0.000000e+00> : vector<4x16xf32>
    %187 = tpu.matmul %185, %125, %cst_111 {dimension_numbers = #tpu.dot_dimension_numbers<[1], [0], [0], [1], [0, 0, 1, 1], [], []>} : vector<4x5xf32>, vector<5x16xf32>, vector<4x16xf32> -> vector<4x16xf32>
    %188 = arith.addf %186, %187 : vector<4x16xf32>
    %c0_112 = arith.constant 0 : index
    %c0_113 = arith.constant 0 : index
    %189 = vector.load %arg19[%c0_112, %c0_113] : memref<8x4xf32, #tpu.memory_space<vmem>>, vector<8x4xf32>
    %190 = arith.addf %35, %108 : vector<4x16xf32>
    %191 = arith.addf %190, %188 : vector<4x16xf32>
    %cst_114 = arith.constant dense<0.000000e+00> : vector<8x16xf32>
    %192 = tpu.matmul %189, %191, %cst_114 {dimension_numbers = #tpu.dot_dimension_numbers<[1], [0], [0], [1], [0, 0, 1, 1], [], []>} : vector<8x4xf32>, vector<4x16xf32>, vector<8x16xf32> -> vector<8x16xf32>
    %193 = arith.addf %10, %192 : vector<8x16xf32>
    %c0_115 = arith.constant 0 : index
    %c0_116 = arith.constant 0 : index
    %194 = vector.load %arg29[%c0_115, %c0_116] : memref<8x16xf32, #tpu.memory_space<vmem>>, vector<8x16xf32>
    tpu.vector_store %arg29[%c0_115, %c0_116], %193 {strides = array<i32>} : memref<8x16xf32, #tpu.memory_space<vmem>>, vector<8x16xf32>,
    return
  }
  func.func @transform_0(%arg0: i32) -> (i32, i32) {
    %c0_i32 = arith.constant 0 : i32
    %c0_i32_0 = arith.constant 0 : i32
    return %arg0, %c0_i32 : i32, i32
  }
  func.func @transform_1(%arg0: i32) -> (i32, i32) {
    %c0_i32 = arith.constant 0 : i32
    %c0_i32_0 = arith.constant 0 : i32
    return %arg0, %c0_i32 : i32, i32
  }
  func.func @transform_2(%arg0: i32) -> (i32, i32) {
    %c0_i32 = arith.constant 0 : i32
    %c0_i32_0 = arith.constant 0 : i32
    %c0_i32_1 = arith.constant 0 : i32
    return %c0_i32, %c0_i32_0 : i32, i32
  }
  func.func @transform_3(%arg0: i32) -> (i32, i32) {
    %c0_i32 = arith.constant 0 : i32
    %c0_i32_0 = arith.constant 0 : i32
    %c0_i32_1 = arith.constant 0 : i32
    return %c0_i32, %c0_i32_0 : i32, i32
  }
  func.func @transform_4(%arg0: i32) -> (i32, i32) {
    %c0_i32 = arith.constant 0 : i32
    %c0_i32_0 = arith.constant 0 : i32
    %c0_i32_1 = arith.constant 0 : i32
    return %c0_i32, %c0_i32_0 : i32, i32
  }
  func.func @transform_5(%arg0: i32) -> (i32, i32) {
    %c0_i32 = arith.constant 0 : i32
    %c0_i32_0 = arith.constant 0 : i32
    %c0_i32_1 = arith.constant 0 : i32
    return %c0_i32, %c0_i32_0 : i32, i32
  }
  func.func @transform_6(%arg0: i32) -> (i32, i32) {
    %c0_i32 = arith.constant 0 : i32
    %c0_i32_0 = arith.constant 0 : i32
    %c0_i32_1 = arith.constant 0 : i32
    return %c0_i32, %c0_i32_0 : i32, i32
  }
  func.func @transform_7(%arg0: i32) -> (i32, i32) {
    %c0_i32 = arith.constant 0 : i32
    %c0_i32_0 = arith.constant 0 : i32
    %c0_i32_1 = arith.constant 0 : i32
    return %c0_i32, %c0_i32_0 : i32, i32
  }
  func.func @transform_8(%arg0: i32) -> (i32, i32) {
    %c0_i32 = arith.constant 0 : i32
    %c0_i32_0 = arith.constant 0 : i32
    %c0_i32_1 = arith.constant 0 : i32
    return %c0_i32, %c0_i32_0 : i32, i32
  }
  func.func @transform_9(%arg0: i32) -> (i32, i32) {
    %c0_i32 = arith.constant 0 : i32
    %c0_i32_0 = arith.constant 0 : i32
    %c0_i32_1 = arith.constant 0 : i32
    return %c0_i32, %c0_i32_0 : i32, i32
  }
  func.func @transform_10(%arg0: i32) -> (i32, i32) {
    %c0_i32 = arith.constant 0 : i32
    %c0_i32_0 = arith.constant 0 : i32
    %c0_i32_1 = arith.constant 0 : i32
    return %c0_i32, %c0_i32_0 : i32, i32
  }
  func.func @transform_11(%arg0: i32) -> (i32, i32) {
    %c0_i32 = arith.constant 0 : i32
    %c0_i32_0 = arith.constant 0 : i32
    %c0_i32_1 = arith.constant 0 : i32
    return %c0_i32, %c0_i32_0 : i32, i32
  }
  func.func @transform_12(%arg0: i32) -> (i32, i32) {
    %c0_i32 = arith.constant 0 : i32
    %c0_i32_0 = arith.constant 0 : i32
    %c0_i32_1 = arith.constant 0 : i32
    return %c0_i32, %c0_i32_0 : i32, i32
  }
  func.func @transform_13(%arg0: i32) -> (i32, i32) {
    %c0_i32 = arith.constant 0 : i32
    %c0_i32_0 = arith.constant 0 : i32
    %c0_i32_1 = arith.constant 0 : i32
    return %c0_i32, %c0_i32_0 : i32, i32
  }
  func.func @transform_14(%arg0: i32) -> (i32, i32) {
    %c0_i32 = arith.constant 0 : i32
    %c0_i32_0 = arith.constant 0 : i32
    %c0_i32_1 = arith.constant 0 : i32
    return %c0_i32, %c0_i32_0 : i32, i32
  }
  func.func @transform_15(%arg0: i32) -> (i32, i32) {
    %c0_i32 = arith.constant 0 : i32
    %c0_i32_0 = arith.constant 0 : i32
    %c0_i32_1 = arith.constant 0 : i32
    return %c0_i32, %c0_i32_0 : i32, i32
  }
  func.func @transform_16(%arg0: i32) -> (i32, i32) {
    %c0_i32 = arith.constant 0 : i32
    %c0_i32_0 = arith.constant 0 : i32
    %c0_i32_1 = arith.constant 0 : i32
    return %c0_i32, %c0_i32_0 : i32, i32
  }
  func.func @transform_17(%arg0: i32) -> (i32, i32) {
    %c0_i32 = arith.constant 0 : i32
    %c0_i32_0 = arith.constant 0 : i32
    %c0_i32_1 = arith.constant 0 : i32
    return %c0_i32, %c0_i32_0 : i32, i32
  }
  func.func @transform_18(%arg0: i32) -> (i32, i32) {
    %c0_i32 = arith.constant 0 : i32
    %c0_i32_0 = arith.constant 0 : i32
    %c0_i32_1 = arith.constant 0 : i32
    return %c0_i32, %c0_i32_0 : i32, i32
  }
  func.func @transform_19(%arg0: i32) -> (i32, i32) {
    %c0_i32 = arith.constant 0 : i32
    %c0_i32_0 = arith.constant 0 : i32
    %c0_i32_1 = arith.constant 0 : i32
    return %c0_i32, %c0_i32_0 : i32, i32
  }
  func.func @transform_20(%arg0: i32) -> (i32, i32) {
    %c0_i32 = arith.constant 0 : i32
    %c0_i32_0 = arith.constant 0 : i32
    %c0_i32_1 = arith.constant 0 : i32
    return %c0_i32, %c0_i32_0 : i32, i32
  }
  func.func @transform_21(%arg0: i32) -> (i32, i32) {
    %c0_i32 = arith.constant 0 : i32
    %c0_i32_0 = arith.constant 0 : i32
    %c0_i32_1 = arith.constant 0 : i32
    return %c0_i32, %c0_i32_0 : i32, i32
  }
  func.func @transform_22(%arg0: i32) -> (i32, i32) {
    %c0_i32 = arith.constant 0 : i32
    %c0_i32_0 = arith.constant 0 : i32
    %c0_i32_1 = arith.constant 0 : i32
    return %c0_i32, %c0_i32_0 : i32, i32
  }
  func.func @transform_23(%arg0: i32) -> (i32, i32) {
    %c0_i32 = arith.constant 0 : i32
    %c0_i32_0 = arith.constant 0 : i32
    %c0_i32_1 = arith.constant 0 : i32
    return %c0_i32, %c0_i32_0 : i32, i32
  }
  func.func @transform_24(%arg0: i32) -> (i32, i32) {
    %c0_i32 = arith.constant 0 : i32
    %c0_i32_0 = arith.constant 0 : i32
    %c0_i32_1 = arith.constant 0 : i32
    return %c0_i32, %c0_i32_0 : i32, i32
  }
  func.func @transform_25(%arg0: i32) -> (i32, i32) {
    %c0_i32 = arith.constant 0 : i32
    %c0_i32_0 = arith.constant 0 : i32
    %c0_i32_1 = arith.constant 0 : i32
    return %c0_i32, %c0_i32_0 : i32, i32
  }
  func.func @transform_26(%arg0: i32) -> (i32, i32) {
    %c0_i32 = arith.constant 0 : i32
    %c0_i32_0 = arith.constant 0 : i32
    %c0_i32_1 = arith.constant 0 : i32
    return %c0_i32, %c0_i32_0 : i32, i32
  }
  func.func @transform_27(%arg0: i32) -> (i32, i32) {
    %c0_i32 = arith.constant 0 : i32
    %c0_i32_0 = arith.constant 0 : i32
    return %arg0, %c0_i32 : i32, i32
  }
  func.func @transform_28(%arg0: i32) -> (i32, i32) {
    %c0_i32 = arith.constant 0 : i32
    %c0_i32_0 = arith.constant 0 : i32
    return %arg0, %c0_i32 : i32, i32
  }
}

</mosaic_0001>

<llo_original>
// kernel: tpu_custom_call.1
$region0: #{tpu_custom_call.1}
  #allocation0 [shape = 'u32[]', space=smem, size = 0x4, offset = 0x4, fixed_abs, tag = 'smem constant byte address 0x4 - core index']
  #allocation1 [shape = 'u32[144,128]{1,0:T(1,128)}', space=vmem, size = 0x12000, scoped, tag = 'internal scratch']
  %s0 = inlined_call_operand.hbm [shape: f32[4,16], index: 0, kind: input, shape index: {}]
  %s1 = inlined_call_operand.hbm [shape: f32[4,16], index: 1, kind: input, shape index: {}]
  %s2 = inlined_call_operand.vmem [shape: f32[16,4], index: 2, kind: input, shape index: {}]
  %s3 = inlined_call_operand.vmem [shape: f32[12,4], index: 3, kind: input, shape index: {}]
  %s4 = inlined_call_operand.hbm [shape: f32[4,4], index: 4, kind: input, shape index: {}]
  %s5 = inlined_call_operand.hbm [shape: f32[4,4], index: 5, kind: input, shape index: {}]
  %s6 = inlined_call_operand.hbm [shape: f32[4,4], index: 6, kind: input, shape index: {}]
  %s7 = inlined_call_operand.hbm [shape: f32[4,4], index: 7, kind: input, shape index: {}]
  %s8 = inlined_call_operand.vmem [shape: f32[4,1], index: 8, kind: input, shape index: {}]
  %s9 = inlined_call_operand.vmem [shape: f32[4,1], index: 9, kind: input, shape index: {}]
  %s10 = inlined_call_operand.hbm [shape: f32[4,4], index: 10, kind: input, shape index: {}]
  %s11 = inlined_call_operand.hbm [shape: f32[4,4], index: 11, kind: input, shape index: {}]
  %s12 = inlined_call_operand.hbm [shape: f32[4,4], index: 12, kind: input, shape index: {}]
  %s13 = inlined_call_operand.hbm [shape: f32[4,4], index: 13, kind: input, shape index: {}]
  %s14 = inlined_call_operand.vmem [shape: f32[4,1], index: 14, kind: input, shape index: {}]
  %s15 = inlined_call_operand.vmem [shape: f32[4,1], index: 15, kind: input, shape index: {}]
  %s16 = inlined_call_operand.hbm [shape: f32[4,4], index: 16, kind: input, shape index: {}]
  %s17 = inlined_call_operand.hbm [shape: f32[4,4], index: 17, kind: input, shape index: {}]
  %s18 = inlined_call_operand.vmem [shape: f32[8,4], index: 18, kind: input, shape index: {}]
  %s19 = inlined_call_operand.vmem [shape: f32[16,9], index: 19, kind: input, shape index: {}]
  %s20 = inlined_call_operand.vmem [shape: f32[16,9], index: 20, kind: input, shape index: {}]
  %s21 = inlined_call_operand.vmem [shape: f32[9,16], index: 21, kind: input, shape index: {}]
  %s22 = inlined_call_operand.vmem [shape: f32[9,16], index: 22, kind: input, shape index: {}]
  %s23 = inlined_call_operand.vmem [shape: f32[8,5], index: 23, kind: input, shape index: {}]
  %s24 = inlined_call_operand.vmem [shape: f32[8,5], index: 24, kind: input, shape index: {}]
  %s25 = inlined_call_operand.vmem [shape: f32[5,16], index: 25, kind: input, shape index: {}]
  %s26 = inlined_call_operand.vmem [shape: f32[5,16], index: 26, kind: input, shape index: {}]
  %s27 = inlined_call_operand.hbm [shape: f32[8,16], index: 27, kind: output, shape index: {0}]
  %s28 = inlined_call_operand.hbm [shape: f32[8,16], index: 28, kind: output, shape index: {1}]
  %29 = xla_tuple %s27, %s28
  %s30 = sld [smem:[#allocation0]]
  $region174: #{tpu_custom_call.1} parent=0
    _
  %s32 = ssub.s32 1, %s30
  %s33 = scalar_select 0, %s32, %s30
  $region1: #{tpu_custom_call.1} parent=0
    #allocation2 [shape = 'u8[2048]{0}', space=vmem, size = 0x800, scoped, tag = 'input window, operand 0, single buffered']
    #allocation3 [shape = 's32[1]{0}', space=sflag, size = 0x4, scoped, tag = 'scoped memory for tpu_custom_call.1']
    #allocation4 [shape = 's32[1]{0}', space=sflag, size = 0x4, scoped, tag = 'scoped memory for tpu_custom_call.1']
    #allocation5 [shape = 'u8[2048]{0}', space=vmem, size = 0x800, scoped, tag = 'input window, operand 1, single buffered']
    #allocation6 [shape = 's32[1]{0}', space=sflag, size = 0x4, scoped, tag = 'scoped memory for tpu_custom_call.1']
    #allocation7 [shape = 'u8[2048]{0}', space=vmem, size = 0x800, scoped, tag = 'input window, operand 4, single buffered']
    #allocation8 [shape = 'u8[2048]{0}', space=vmem, size = 0x800, scoped, tag = 'input window, operand 5, single buffered']
    #allocation9 [shape = 's32[1]{0}', space=sflag, size = 0x4, scoped, tag = 'scoped memory for tpu_custom_call.1']
    #allocation10 [shape = 'u8[2048]{0}', space=vmem, size = 0x800, scoped, tag = 'input window, operand 6, single buffered']
    #allocation11 [shape = 'u8[2048]{0}', space=vmem, size = 0x800, scoped, tag = 'input window, operand 7, single buffered']
    #allocation12 [shape = 's32[1]{0}', space=sflag, size = 0x4, scoped, tag = 'scoped memory for tpu_custom_call.1']
    #allocation13 [shape = 'u8[2048]{0}', space=vmem, size = 0x800, scoped, tag = 'input window, operand 10, single buffered']
    #allocation14 [shape = 'u8[2048]{0}', space=vmem, size = 0x800, scoped, tag = 'input window, operand 11, single buffered']
    #allocation15 [shape = 's32[1]{0}', space=sflag, size = 0x4, scoped, tag = 'scoped memory for tpu_custom_call.1']
    #allocation16 [shape = 'u8[2048]{0}', space=vmem, size = 0x800, scoped, tag = 'input window, operand 12, single buffered']
    #allocation17 [shape = 'u8[2048]{0}', space=vmem, size = 0x800, scoped, tag = 'input window, operand 13, single buffered']
    #allocation18 [shape = 's32[1]{0}', space=sflag, size = 0x4, scoped, tag = 'scoped memory for tpu_custom_call.1']
    #allocation19 [shape = 'u8[2048]{0}', space=vmem, size = 0x800, scoped, tag = 'input window, operand 16, single buffered']
    #allocation20 [shape = 'u8[2048]{0}', space=vmem, size = 0x800, scoped, tag = 'input window, operand 17, single buffered']
    #allocation21 [shape = 's32[1]{0}', space=sflag, size = 0x4, scoped, tag = 'scoped memory for tpu_custom_call.1']
    #allocation22 [shape = 'u8[4096]{0}', space=vmem, size = 0x1000, scoped, tag = 'output window, operand 0, single buffered']
    #allocation23 [shape = 'u8[4096]{0}', space=vmem, size = 0x1000, scoped, tag = 'output window, operand 1, single buffered']
    #allocation24 [shape = 's32[1]{0}', space=sflag, size = 0x4, scoped, tag = 'scoped memory for tpu_custom_call.1']
    %34 = vsyncpa [#allocation3], 0
    %35 = vsyncpa [#allocation6], 0
    %36 = vsyncpa [#allocation9], 0
    %37 = vsyncpa [#allocation12], 0
    %38 = vsyncpa [#allocation15], 0
    %39 = vsyncpa [#allocation18], 0
    %40 = vsyncpa [#allocation21], 0
    %41 = vsyncpa [#allocation4], 0
    %42 = vsyncpa [#allocation24], 0
    // Predicated region
    $region2: #{tpu_custom_call.1} parent=1 // pred_check
      _
    $region3: #{tpu_custom_call.1} parent=1 // pred_check_branch
      %44 = sbr.rel (0) target = $region5
    $region4: #{tpu_custom_call.1} parent=1 // pred_region
      %s46 = ssub.s32 64, 64
      %47 = vsyncadd [#allocation3], %s46
      %s49 = sshll.u32 [#allocation2], 4
      %s50 = int_to_ptr.vmem [resolvable:$true] %s49
      %52 = dma.hbm_to_vmem [thread:$0]  %s0, 64, %s50, [#allocation3]
    $region5: #{tpu_custom_call.1} parent=1 // pred_fallthru
      _
    // Predicated region
    $region6: #{tpu_custom_call.1} parent=1 // pred_check
      _
    $region7: #{tpu_custom_call.1} parent=1 // pred_check_branch
      %54 = sbr.rel (0) target = $region9
    $region8: #{tpu_custom_call.1} parent=1 // pred_region
      %s56 = ssub.s32 64, 64
      %57 = vsyncadd [#allocation6], %s56
      %s59 = sshll.u32 [#allocation5], 4
      %s60 = int_to_ptr.vmem [resolvable:$true] %s59
      %62 = dma.hbm_to_vmem [thread:$0]  %s1, 64, %s60, [#allocation6]
    $region9: #{tpu_custom_call.1} parent=1 // pred_fallthru
      _
    // Predicated region
    $region10: #{tpu_custom_call.1} parent=1 // pred_check
      _
    $region11: #{tpu_custom_call.1} parent=1 // pred_check_branch
      %64 = sbr.rel (0) target = $region13
    $region12: #{tpu_custom_call.1} parent=1 // pred_region
      _
    $region13: #{tpu_custom_call.1} parent=1 // pred_fallthru
      _
    // Predicated region
    $region14: #{tpu_custom_call.1} parent=1 // pred_check
      _
    $region15: #{tpu_custom_call.1} parent=1 // pred_check_branch
      %66 = sbr.rel (0) target = $region17
    $region16: #{tpu_custom_call.1} parent=1 // pred_region
      _
    $region17: #{tpu_custom_call.1} parent=1 // pred_fallthru
      _
    // Predicated region
    $region18: #{tpu_custom_call.1} parent=1 // pred_check
      _
    $region19: #{tpu_custom_call.1} parent=1 // pred_check_branch
      %68 = sbr.rel (0) target = $region21
    $region20: #{tpu_custom_call.1} parent=1 // pred_region
      %s70 = ssub.s32 64, 64
      %71 = vsyncadd [#allocation6], %s70
      %s73 = sshll.u32 [#allocation7], 4
      %s74 = int_to_ptr.vmem [resolvable:$true] %s73
      %76 = dma.hbm_to_vmem [thread:$0]  %s4, 64, %s74, [#allocation6]
    $region21: #{tpu_custom_call.1} parent=1 // pred_fallthru
      _
    // Predicated region
    $region22: #{tpu_custom_call.1} parent=1 // pred_check
      _
    $region23: #{tpu_custom_call.1} parent=1 // pred_check_branch
      %78 = sbr.rel (0) target = $region25
    $region24: #{tpu_custom_call.1} parent=1 // pred_region
      %s80 = ssub.s32 64, 64
      %81 = vsyncadd [#allocation9], %s80
      %s83 = sshll.u32 [#allocation8], 4
      %s84 = int_to_ptr.vmem [resolvable:$true] %s83
      %86 = dma.hbm_to_vmem [thread:$0]  %s5, 64, %s84, [#allocation9]
    $region25: #{tpu_custom_call.1} parent=1 // pred_fallthru
      _
    // Predicated region
    $region26: #{tpu_custom_call.1} parent=1 // pred_check
      _
    $region27: #{tpu_custom_call.1} parent=1 // pred_check_branch
      %88 = sbr.rel (0) target = $region29
    $region28: #{tpu_custom_call.1} parent=1 // pred_region
      %s90 = ssub.s32 64, 64
      %91 = vsyncadd [#allocation9], %s90
      %s93 = sshll.u32 [#allocation10], 4
      %s94 = int_to_ptr.vmem [resolvable:$true] %s93
      %96 = dma.hbm_to_vmem [thread:$0]  %s6, 64, %s94, [#allocation9]
    $region29: #{tpu_custom_call.1} parent=1 // pred_fallthru
      _
    // Predicated region
    $region30: #{tpu_custom_call.1} parent=1 // pred_check
      _
    $region31: #{tpu_custom_call.1} parent=1 // pred_check_branch
      %98 = sbr.rel (0) target = $region33
    $region32: #{tpu_custom_call.1} parent=1 // pred_region
      %s100 = ssub.s32 64, 64
      %101 = vsyncadd [#allocation12], %s100
      %s103 = sshll.u32 [#allocation11], 4
      %s104 = int_to_ptr.vmem [resolvable:$true] %s103
      %106 = dma.hbm_to_vmem [thread:$0]  %s7, 64, %s104, [#allocation12]
    $region33: #{tpu_custom_call.1} parent=1 // pred_fallthru
      _
    // Predicated region
    $region34: #{tpu_custom_call.1} parent=1 // pred_check
      _
    $region35: #{tpu_custom_call.1} parent=1 // pred_check_branch
      %108 = sbr.rel (0) target = $region37
    $region36: #{tpu_custom_call.1} parent=1 // pred_region
      _
    $region37: #{tpu_custom_call.1} parent=1 // pred_fallthru
      _
    // Predicated region
    $region38: #{tpu_custom_call.1} parent=1 // pred_check
      _
    $region39: #{tpu_custom_call.1} parent=1 // pred_check_branch
      %110 = sbr.rel (0) target = $region41
    $region40: #{tpu_custom_call.1} parent=1 // pred_region
      _
    $region41: #{tpu_custom_call.1} parent=1 // pred_fallthru
      _
    // Predicated region
    $region42: #{tpu_custom_call.1} parent=1 // pred_check
      _
    $region43: #{tpu_custom_call.1} parent=1 // pred_check_branch
      %112 = sbr.rel (0) target = $region45
    $region44: #{tpu_custom_call.1} parent=1 // pred_region
      %s114 = ssub.s32 64, 64
      %115 = vsyncadd [#allocation12], %s114
      %s117 = sshll.u32 [#allocation13], 4
      %s118 = int_to_ptr.vmem [resolvable:$true] %s117
      %120 = dma.hbm_to_vmem [thread:$0]  %s10, 64, %s118, [#allocation12]
    $region45: #{tpu_custom_call.1} parent=1 // pred_fallthru
      _
    // Predicated region
    $region46: #{tpu_custom_call.1} parent=1 // pred_check
      _
    $region47: #{tpu_custom_call.1} parent=1 // pred_check_branch
      %122 = sbr.rel (0) target = $region49
    $region48: #{tpu_custom_call.1} parent=1 // pred_region
      %s124 = ssub.s32 64, 64
      %125 = vsyncadd [#allocation15], %s124
      %s127 = sshll.u32 [#allocation14], 4
      %s128 = int_to_ptr.vmem [resolvable:$true] %s127
      %130 = dma.hbm_to_vmem [thread:$0]  %s11, 64, %s128, [#allocation15]
    $region49: #{tpu_custom_call.1} parent=1 // pred_fallthru
      _
    // Predicated region
    $region50: #{tpu_custom_call.1} parent=1 // pred_check
      _
    $region51: #{tpu_custom_call.1} parent=1 // pred_check_branch
      %132 = sbr.rel (0) target = $region53
    $region52: #{tpu_custom_call.1} parent=1 // pred_region
      %s134 = ssub.s32 64, 64
      %135 = vsyncadd [#allocation15], %s134
      %s137 = sshll.u32 [#allocation16], 4
      %s138 = int_to_ptr.vmem [resolvable:$true] %s137
      %140 = dma.hbm_to_vmem [thread:$0]  %s12, 64, %s138, [#allocation15]
    $region53: #{tpu_custom_call.1} parent=1 // pred_fallthru
      _
    // Predicated region
    $region54: #{tpu_custom_call.1} parent=1 // pred_check
      _
    $region55: #{tpu_custom_call.1} parent=1 // pred_check_branch
      %142 = sbr.rel (0) target = $region57
    $region56: #{tpu_custom_call.1} parent=1 // pred_region
      %s144 = ssub.s32 64, 64
      %145 = vsyncadd [#allocation18], %s144
      %s147 = sshll.u32 [#allocation17], 4
      %s148 = int_to_ptr.vmem [resolvable:$true] %s147
      %150 = dma.hbm_to_vmem [thread:$0]  %s13, 64, %s148, [#allocation18]
    $region57: #{tpu_custom_call.1} parent=1 // pred_fallthru
      _
    // Predicated region
    $region58: #{tpu_custom_call.1} parent=1 // pred_check
      _
    $region59: #{tpu_custom_call.1} parent=1 // pred_check_branch
      %152 = sbr.rel (0) target = $region61
    $region60: #{tpu_custom_call.1} parent=1 // pred_region
      _
    $region61: #{tpu_custom_call.1} parent=1 // pred_fallthru
      _
    // Predicated region
    $region62: #{tpu_custom_call.1} parent=1 // pred_check
      _
    $region63: #{tpu_custom_call.1} parent=1 // pred_check_branch
      %154 = sbr.rel (0) target = $region65
    $region64: #{tpu_custom_call.1} parent=1 // pred_region
      _
    $region65: #{tpu_custom_call.1} parent=1 // pred_fallthru
      _
    // Predicated region
    $region66: #{tpu_custom_call.1} parent=1 // pred_check
      _
    $region67: #{tpu_custom_call.1} parent=1 // pred_check_branch
      %156 = sbr.rel (0) target = $region69
    $region68: #{tpu_custom_call.1} parent=1 // pred_region
      %s158 = ssub.s32 64, 64
      %159 = vsyncadd [#allocation18], %s158
      %s161 = sshll.u32 [#allocation19], 4
      %s162 = int_to_ptr.vmem [resolvable:$true] %s161
      %164 = dma.hbm_to_vmem [thread:$0]  %s16, 64, %s162, [#allocation18]
    $region69: #{tpu_custom_call.1} parent=1 // pred_fallthru
      _
    // Predicated region
    $region70: #{tpu_custom_call.1} parent=1 // pred_check
      _
    $region71: #{tpu_custom_call.1} parent=1 // pred_check_branch
      %166 = sbr.rel (0) target = $region73
    $region72: #{tpu_custom_call.1} parent=1 // pred_region
      %s168 = ssub.s32 64, 64
      %169 = vsyncadd [#allocation21], %s168
      %s171 = sshll.u32 [#allocation20], 4
      %s172 = int_to_ptr.vmem [resolvable:$true] %s171
      %174 = dma.hbm_to_vmem [thread:$0]  %s17, 64, %s172, [#allocation21]
    $region73: #{tpu_custom_call.1} parent=1 // pred_fallthru
      _
    // Predicated region
    $region74: #{tpu_custom_call.1} parent=1 // pred_check
      _
    $region75: #{tpu_custom_call.1} parent=1 // pred_check_branch
      %176 = sbr.rel (0) target = $region77
    $region76: #{tpu_custom_call.1} parent=1 // pred_region
      _
    $region77: #{tpu_custom_call.1} parent=1 // pred_fallthru
      _
    // Predicated region
    $region78: #{tpu_custom_call.1} parent=1 // pred_check
      _
    $region79: #{tpu_custom_call.1} parent=1 // pred_check_branch
      %178 = sbr.rel (0) target = $region81
    $region80: #{tpu_custom_call.1} parent=1 // pred_region
      _
    $region81: #{tpu_custom_call.1} parent=1 // pred_fallthru
      _
    // Predicated region
    $region82: #{tpu_custom_call.1} parent=1 // pred_check
      _
    $region83: #{tpu_custom_call.1} parent=1 // pred_check_branch
      %180 = sbr.rel (0) target = $region85
    $region84: #{tpu_custom_call.1} parent=1 // pred_region
      _
    $region85: #{tpu_custom_call.1} parent=1 // pred_fallthru
      _
    // Predicated region
    $region86: #{tpu_custom_call.1} parent=1 // pred_check
      _
    $region87: #{tpu_custom_call.1} parent=1 // pred_check_branch
      %182 = sbr.rel (0) target = $region89
    $region88: #{tpu_custom_call.1} parent=1 // pred_region
      _
    $region89: #{tpu_custom_call.1} parent=1 // pred_fallthru
      _
    // Predicated region
    $region90: #{tpu_custom_call.1} parent=1 // pred_check
      _
    $region91: #{tpu_custom_call.1} parent=1 // pred_check_branch
      %184 = sbr.rel (0) target = $region93
    $region92: #{tpu_custom_call.1} parent=1 // pred_region
      _
    $region93: #{tpu_custom_call.1} parent=1 // pred_fallthru
      _
    // Predicated region
    $region94: #{tpu_custom_call.1} parent=1 // pred_check
      _
    $region95: #{tpu_custom_call.1} parent=1 // pred_check_branch
      %186 = sbr.rel (0) target = $region97
    $region96: #{tpu_custom_call.1} parent=1 // pred_region
      _
    $region97: #{tpu_custom_call.1} parent=1 // pred_fallthru
      _
    // Predicated region
    $region98: #{tpu_custom_call.1} parent=1 // pred_check
      _
    $region99: #{tpu_custom_call.1} parent=1 // pred_check_branch
      %188 = sbr.rel (0) target = $region101
    $region100: #{tpu_custom_call.1} parent=1 // pred_region
      _
    $region101: #{tpu_custom_call.1} parent=1 // pred_fallthru
      _
    // Predicated region
    $region102: #{tpu_custom_call.1} parent=1 // pred_check
      _
    $region103: #{tpu_custom_call.1} parent=1 // pred_check_branch
      %190 = sbr.rel (0) target = $region105
    $region104: #{tpu_custom_call.1} parent=1 // pred_region
      _
    $region105: #{tpu_custom_call.1} parent=1 // pred_fallthru
      _
    // Predicated region
    $region106: #{tpu_custom_call.1} parent=1 // pred_check
      _
    $region107: #{tpu_custom_call.1} parent=1 // pred_check_branch
      %192 = sbr.rel (0) target = $region109
    $region108: #{tpu_custom_call.1} parent=1 // pred_region
      _
    $region109: #{tpu_custom_call.1} parent=1 // pred_fallthru
      _
    // Predicated region
    $region110: #{tpu_custom_call.1} parent=1 // pred_check
      _
    $region111: #{tpu_custom_call.1} parent=1 // pred_check_branch
      %194 = sbr.rel (0) target = $region113
    $region112: #{tpu_custom_call.1} parent=1 // pred_region
      %195 = dma.done [#allocation3], 64
    $region113: #{tpu_custom_call.1} parent=1 // pred_fallthru
      _
    // Predicated region
    $region114: #{tpu_custom_call.1} parent=1 // pred_check
      _
    $region115: #{tpu_custom_call.1} parent=1 // pred_check_branch
      %197 = sbr.rel (0) target = $region117
    $region116: #{tpu_custom_call.1} parent=1 // pred_region
      %198 = dma.done [#allocation6], 64
    $region117: #{tpu_custom_call.1} parent=1 // pred_fallthru
      _
    // Predicated region
    $region118: #{tpu_custom_call.1} parent=1 // pred_check
      _
    $region119: #{tpu_custom_call.1} parent=1 // pred_check_branch
      %200 = sbr.rel (0) target = $region121
    $region120: #{tpu_custom_call.1} parent=1 // pred_region
      %201 = dma.done [#allocation6], 64
    $region121: #{tpu_custom_call.1} parent=1 // pred_fallthru
      _
    // Predicated region
    $region122: #{tpu_custom_call.1} parent=1 // pred_check
      _
    $region123: #{tpu_custom_call.1} parent=1 // pred_check_branch
      %203 = sbr.rel (0) target = $region125
    $region124: #{tpu_custom_call.1} parent=1 // pred_region
      %204 = dma.done [#allocation9], 64
    $region125: #{tpu_custom_call.1} parent=1 // pred_fallthru
      _
    // Predicated region
    $region126: #{tpu_custom_call.1} parent=1 // pred_check
      _
    $region127: #{tpu_custom_call.1} parent=1 // pred_check_branch
      %206 = sbr.rel (0) target = $region129
    $region128: #{tpu_custom_call.1} parent=1 // pred_region
      %207 = dma.done [#allocation9], 64
    $region129: #{tpu_custom_call.1} parent=1 // pred_fallthru
      _
    // Predicated region
    $region130: #{tpu_custom_call.1} parent=1 // pred_check
      _
    $region131: #{tpu_custom_call.1} parent=1 // pred_check_branch
      %209 = sbr.rel (0) target = $region133
    $region132: #{tpu_custom_call.1} parent=1 // pred_region
      %210 = dma.done [#allocation12], 64
    $region133: #{tpu_custom_call.1} parent=1 // pred_fallthru
      _
    // Predicated region
    $region134: #{tpu_custom_call.1} parent=1 // pred_check
      _
    $region135: #{tpu_custom_call.1} parent=1 // pred_check_branch
      %212 = sbr.rel (0) target = $region137
    $region136: #{tpu_custom_call.1} parent=1 // pred_region
      %213 = dma.done [#allocation12], 64
    $region137: #{tpu_custom_call.1} parent=1 // pred_fallthru
      _
    // Predicated region
    $region138: #{tpu_custom_call.1} parent=1 // pred_check
      _
    $region139: #{tpu_custom_call.1} parent=1 // pred_check_branch
      %215 = sbr.rel (0) target = $region141
    $region140: #{tpu_custom_call.1} parent=1 // pred_region
      %216 = dma.done [#allocation15], 64
    $region141: #{tpu_custom_call.1} parent=1 // pred_fallthru
      _
    // Predicated region
    $region142: #{tpu_custom_call.1} parent=1 // pred_check
      _
    $region143: #{tpu_custom_call.1} parent=1 // pred_check_branch
      %218 = sbr.rel (0) target = $region145
    $region144: #{tpu_custom_call.1} parent=1 // pred_region
      %219 = dma.done [#allocation15], 64
    $region145: #{tpu_custom_call.1} parent=1 // pred_fallthru
      _
    // Predicated region
    $region146: #{tpu_custom_call.1} parent=1 // pred_check
      _
    $region147: #{tpu_custom_call.1} parent=1 // pred_check_branch
      %221 = sbr.rel (0) target = $region149
    $region148: #{tpu_custom_call.1} parent=1 // pred_region
      %222 = dma.done [#allocation18], 64
    $region149: #{tpu_custom_call.1} parent=1 // pred_fallthru
      _
    // Predicated region
    $region150: #{tpu_custom_call.1} parent=1 // pred_check
      _
    $region151: #{tpu_custom_call.1} parent=1 // pred_check_branch
      %224 = sbr.rel (0) target = $region153
    $region152: #{tpu_custom_call.1} parent=1 // pred_region
      %225 = dma.done [#allocation18], 64
    $region153: #{tpu_custom_call.1} parent=1 // pred_fallthru
      _
    // Predicated region
    $region154: #{tpu_custom_call.1} parent=1 // pred_check
      _
    $region155: #{tpu_custom_call.1} parent=1 // pred_check_branch
      %227 = sbr.rel (0) target = $region157
    $region156: #{tpu_custom_call.1} parent=1 // pred_region
      %228 = dma.done [#allocation21], 64
    $region157: #{tpu_custom_call.1} parent=1 // pred_fallthru
      _
    %v229 = vld [vmem:[%s2] sm:$0xff]
    %v230 = vld [vmem:[%s2 + $0x8] sm:$0xff]
    %v231 = vld [vmem:[#allocation2] sm:$0xf]
    %vm232 = vcmask 31744
    %v234 = vsel %vm232, %v229, 0
    %v237 = vsel %vm232, %v230, 0
    %vm239 = vcmask 1043456
    %v241 = vsel %vm239, %v231, 0
    %243 = vmatprep.subr.mxu0 0.0
    %244 = vmatpush1.msra.mxu0 0.0
    %245 = vmatprep.subr.mxu0 0.0
    %246 = vmatpush1.msra.mxu0 0.0
    %247 = vmatprep.subr.mxu0 0.0
    %248 = vmatpush1.msra.mxu0 0.0
    %249 = vmatprep.subr.mxu0 0.0
    %250 = vmatpush1.msra.mxu0 0.0
    %251 = vmatprep.subr.mxu0 0.0
    %252 = vmatpush1.msra.mxu0 0.0
    %253 = vmatprep.subr.mxu0 0.0
    %254 = vmatpush1.msra.mxu0 0.0
    %255 = vmatprep.subr.mxu0 0.0
    %256 = vmatpush1.msra.mxu0 0.0
    %257 = vmatprep.subr.mxu0 0.0
    %258 = vmatpush1.msra.mxu0 0.0
    %259 = vmatprep.subr.mxu0 0.0
    %260 = vmatpush1.msra.mxu0 0.0
    %261 = vmatprep.subr.mxu0 0.0
    %262 = vmatpush1.msra.mxu0 0.0
    %263 = vmatprep.subr.mxu0 0.0
    %264 = vmatpush1.msra.mxu0 0.0
    %265 = vmatprep.subr.mxu0 0.0
    %266 = vmatpush1.msra.mxu0 0.0
    %267 = vmatprep.subr.mxu0 0.0
    %268 = vmatpush1.msra.mxu0 0.0
    %269 = vmatprep.subr.mxu0 0.0
    %270 = vmatpush1.msra.mxu0 0.0
    %271 = vmatprep.subr.mxu0 0.0
    %272 = vmatpush1.msra.mxu0 0.0
    %273 = vmatprep.subr.mxu0 0.0
    %274 = vmatpush1.msra.mxu0 %v241
    %275 = vmatprep.subr.mxu0 0.0
    %276 = vmatpush2.msra.mxu0 0.0
    %277 = vmatprep.subr.mxu0 0.0
    %278 = vmatpush2.msra.mxu0 0.0
    %279 = vmatprep.subr.mxu0 0.0
    %280 = vmatpush2.msra.mxu0 0.0
    %281 = vmatprep.subr.mxu0 0.0
    %282 = vmatpush2.msra.mxu0 0.0
    %283 = vmatprep.subr.mxu0 0.0
    %284 = vmatpush2.msra.mxu0 0.0
    %285 = vmatprep.subr.mxu0 0.0
    %286 = vmatpush2.msra.mxu0 0.0
    %287 = vmatprep.subr.mxu0 0.0
    %288 = vmatpush2.msra.mxu0 0.0
    %289 = vmatprep.subr.mxu0 0.0
    %290 = vmatpush2.msra.mxu0 0.0
    %291 = vmatprep.subr.mxu0 0.0
    %292 = vmatpush2.msra.mxu0 0.0
    %293 = vmatprep.subr.mxu0 0.0
    %294 = vmatpush2.msra.mxu0 0.0
    %295 = vmatprep.subr.mxu0 0.0
    %296 = vmatpush2.msra.mxu0 0.0
    %297 = vmatprep.subr.mxu0 0.0
    %298 = vmatpush2.msra.mxu0 0.0
    %299 = vmatprep.subr.mxu0 0.0
    %300 = vmatpush2.msra.mxu0 0.0
    %301 = vmatprep.subr.mxu0 0.0
    %302 = vmatpush2.msra.mxu0 0.0
    %303 = vmatprep.subr.mxu0 0.0
    %304 = vmatpush2.msra.mxu0 0.0
    %305 = vmatprep.subr.mxu0 0.0
    %306 = vmatpush2.msra.mxu0 0.0
    %307 = vmatprep.mubr.f32.mxu0 0.0
    %308 = vmatmul.mubr.f32.gmra.mxu0 %v234
    %v309 = vpop.f32.mrf.mxu0
    %v310 = vadd.f32 0.0, %v309
    %v311 = vpop.f32.mrf.mxu0
    %312 = vmatprep.mubr.f32.mxu0 0.0
    %313 = vmatmul.mubr.f32.gmra.mxu0 %v237
    %v314 = vpop.f32.mrf.mxu0
    %v315 = vadd.f32 0.0, %v314
    %v316 = vpop.f32.mrf.mxu0
    %317 = vdwg.mxu0
    %v318 = vld [vmem:[%s3] sm:$0xff]
    %v319 = vld [vmem:[%s3 + $0x8] sm:$0xf]
    %v320 = vld [vmem:[#allocation5] sm:$0xf]
    %v322 = vsel %vm232, %v318, 0
    %v325 = vsel %vm232, %v319, 0
    %v328 = vsel %vm239, %v320, 0
    %330 = vmatprep.subr.mxu0 0.0
    %331 = vmatpush1.msra.mxu0 0.0
    %332 = vmatprep.subr.mxu0 0.0
    %333 = vmatpush1.msra.mxu0 0.0
    %334 = vmatprep.subr.mxu0 0.0
    %335 = vmatpush1.msra.mxu0 0.0
    %336 = vmatprep.subr.mxu0 0.0
    %337 = vmatpush1.msra.mxu0 0.0
    %338 = vmatprep.subr.mxu0 0.0
    %339 = vmatpush1.msra.mxu0 0.0
    %340 = vmatprep.subr.mxu0 0.0
    %341 = vmatpush1.msra.mxu0 0.0
    %342 = vmatprep.subr.mxu0 0.0
    %343 = vmatpush1.msra.mxu0 0.0
    %344 = vmatprep.subr.mxu0 0.0
    %345 = vmatpush1.msra.mxu0 0.0
    %346 = vmatprep.subr.mxu0 0.0
    %347 = vmatpush1.msra.mxu0 0.0
    %348 = vmatprep.subr.mxu0 0.0
    %349 = vmatpush1.msra.mxu0 0.0
    %350 = vmatprep.subr.mxu0 0.0
    %351 = vmatpush1.msra.mxu0 0.0
    %352 = vmatprep.subr.mxu0 0.0
    %353 = vmatpush1.msra.mxu0 0.0
    %354 = vmatprep.subr.mxu0 0.0
    %355 = vmatpush1.msra.mxu0 0.0
    %356 = vmatprep.subr.mxu0 0.0
    %357 = vmatpush1.msra.mxu0 0.0
    %358 = vmatprep.subr.mxu0 0.0
    %359 = vmatpush1.msra.mxu0 0.0
    %360 = vmatprep.subr.mxu0 0.0
    %361 = vmatpush1.msra.mxu0 %v328
    %362 = vmatprep.subr.mxu0 0.0
    %363 = vmatpush2.msra.mxu0 0.0
    %364 = vmatprep.subr.mxu0 0.0
    %365 = vmatpush2.msra.mxu0 0.0
    %366 = vmatprep.subr.mxu0 0.0
    %367 = vmatpush2.msra.mxu0 0.0
    %368 = vmatprep.subr.mxu0 0.0
    %369 = vmatpush2.msra.mxu0 0.0
    %370 = vmatprep.subr.mxu0 0.0
    %371 = vmatpush2.msra.mxu0 0.0
    %372 = vmatprep.subr.mxu0 0.0
    %373 = vmatpush2.msra.mxu0 0.0
    %374 = vmatprep.subr.mxu0 0.0
    %375 = vmatpush2.msra.mxu0 0.0
    %376 = vmatprep.subr.mxu0 0.0
    %377 = vmatpush2.msra.mxu0 0.0
    %378 = vmatprep.subr.mxu0 0.0
    %379 = vmatpush2.msra.mxu0 0.0
    %380 = vmatprep.subr.mxu0 0.0
    %381 = vmatpush2.msra.mxu0 0.0
    %382 = vmatprep.subr.mxu0 0.0
    %383 = vmatpush2.msra.mxu0 0.0
    %384 = vmatprep.subr.mxu0 0.0
    %385 = vmatpush2.msra.mxu0 0.0
    %386 = vmatprep.subr.mxu0 0.0
    %387 = vmatpush2.msra.mxu0 0.0
    %388 = vmatprep.subr.mxu0 0.0
    %389 = vmatpush2.msra.mxu0 0.0
    %390 = vmatprep.subr.mxu0 0.0
    %391 = vmatpush2.msra.mxu0 0.0
    %392 = vmatprep.subr.mxu0 0.0
    %393 = vmatpush2.msra.mxu0 0.0
    %394 = vmatprep.mubr.f32.mxu0 0.0
    %395 = vmatmul.mubr.f32.gmra.mxu0 %v322
    %v396 = vpop.f32.mrf.mxu0
    %v397 = vadd.f32 0.0, %v396
    %v398 = vpop.f32.mrf.mxu0
    %399 = vmatprep.mubr.f32.mxu0 0.0
    %400 = vmatmul.mubr.f32.gmra.mxu0 %v325
    %v401 = vpop.f32.mrf.mxu0
    %v402 = vadd.f32 0.0, %v401
    %v403 = vpop.f32.mrf.mxu0
    %404 = vdwg.mxu0
    %v405 = vadd.f32 %v310, %v397
    %vm406 = vcmask 130048
    %407 = vst.msk [vmem:[#allocation22] sm:$0xff] %vm406, %v405
    %vm408 = vcmask 125952
    %v409 = vsel %vm408, %v402, 0.0
    %410 = vadd.xlane.f32.xlu0 %v409
    %v411 = vpop.xlane.xlu0 %410
    %v412 = vrcp.pop 16.0
    %v413 = vmul.f32 %v411, %v412
    %v414 = vsub.f32 %v402, %v413
    %v415 = vmul.f32 %v414, %v414
    %v416 = vsel %vm408, %v415, 0.0
    %417 = vadd.xlane.f32.xlu0 %v416
    %v418 = vpop.xlane.xlu0 %417
    %v419 = vmul.f32 %v418, %v412
    %v420 = vadd.f32 %v419, 1e-05
    %v421 = vrsqrt.pop %v420
    %v422 = vmul.f32 %v414, %v421
    %v423 = vmul.f32 %v422, 0.5
    %v424 = vmul.f32 %v422, 0.70710677
    %v425 = verf.f32.pop %v424
    %v426 = vadd.f32 %v425, 1.0
    %v427 = vmul.f32 %v423, %v426
    %v428 = vld [vmem:[#allocation7] sm:$0xf]
    %v429 = vld [vmem:[#allocation8] sm:$0xf]
    %v430 = vld [vmem:[#allocation10] sm:$0xf]
    %v431 = vld [vmem:[#allocation11] sm:$0xf]
    %v432 = vld [vmem:[%s8] sm:$0xf]
    %v433 = vld [vmem:[%s9] sm:$0xf]
    %v434 = vld [vmem:[%s19] sm:$0xff]
    %v435 = vld [vmem:[%s19 + $0x8] sm:$0xff]
    %v436 = vld [vmem:[%s20] sm:$0xff]
    %v437 = vld [vmem:[%s20 + $0x8] sm:$0xff]
    %v438 = vld [vmem:[%s21] sm:$0xff]
    %v439 = vld [vmem:[%s21 + $0x8] sm:$0x1]
    %v440 = vld [vmem:[%s22] sm:$0xff]
    %v441 = vld [vmem:[%s22 + $0x8] sm:$0x1]
    %v443 = vsel %vm406, %v427, 0
    %445 = vmatprep.subr.mxu0 0.0
    %446 = vmatpush1.msra.mxu0 0.0
    %447 = vmatprep.subr.mxu0 0.0
    %448 = vmatpush1.msra.mxu0 0.0
    %449 = vmatprep.subr.mxu0 0.0
    %450 = vmatpush1.msra.mxu0 0.0
    %451 = vmatprep.subr.mxu0 0.0
    %452 = vmatpush1.msra.mxu0 0.0
    %453 = vmatprep.subr.mxu0 0.0
    %454 = vmatpush1.msra.mxu0 0.0
    %455 = vmatprep.subr.mxu0 0.0
    %456 = vmatpush1.msra.mxu0 0.0
    %457 = vmatprep.subr.mxu0 0.0
    %458 = vmatpush1.msra.mxu0 0.0
    %459 = vmatprep.subr.mxu0 0.0
    %460 = vmatpush1.msra.mxu0 0.0
    %461 = vmatprep.subr.mxu0 0.0
    %462 = vmatpush1.msra.mxu0 0.0
    %463 = vmatprep.subr.mxu0 0.0
    %464 = vmatpush1.msra.mxu0 0.0
    %465 = vmatprep.subr.mxu0 0.0
    %466 = vmatpush1.msra.mxu0 0.0
    %467 = vmatprep.subr.mxu0 0.0
    %468 = vmatpush1.msra.mxu0 0.0
    %469 = vmatprep.subr.mxu0 0.0
    %470 = vmatpush1.msra.mxu0 0.0
    %471 = vmatprep.subr.mxu0 0.0
    %472 = vmatpush1.msra.mxu0 0.0
    %473 = vmatprep.subr.mxu0 0.0
    %474 = vmatpush1.msra.mxu0 %v435
    %475 = vmatprep.subr.mxu0 0.0
    %476 = vmatpush1.msra.mxu0 %v434
    %477 = vmatprep.subr.mxu0 0.0
    %478 = vmatpush2.msra.mxu0 0.0
    %479 = vmatprep.subr.mxu0 0.0
    %480 = vmatpush2.msra.mxu0 0.0
    %481 = vmatprep.subr.mxu0 0.0
    %482 = vmatpush2.msra.mxu0 0.0
    %483 = vmatprep.subr.mxu0 0.0
    %484 = vmatpush2.msra.mxu0 0.0
    %485 = vmatprep.subr.mxu0 0.0
    %486 = vmatpush2.msra.mxu0 0.0
    %487 = vmatprep.subr.mxu0 0.0
    %488 = vmatpush2.msra.mxu0 0.0
    %489 = vmatprep.subr.mxu0 0.0
    %490 = vmatpush2.msra.mxu0 0.0
    %491 = vmatprep.subr.mxu0 0.0
    %492 = vmatpush2.msra.mxu0 0.0
    %493 = vmatprep.subr.mxu0 0.0
    %494 = vmatpush2.msra.mxu0 0.0
    %495 = vmatprep.subr.mxu0 0.0
    %496 = vmatpush2.msra.mxu0 0.0
    %497 = vmatprep.subr.mxu0 0.0
    %498 = vmatpush2.msra.mxu0 0.0
    %499 = vmatprep.subr.mxu0 0.0
    %500 = vmatpush2.msra.mxu0 0.0
    %501 = vmatprep.subr.mxu0 0.0
    %502 = vmatpush2.msra.mxu0 0.0
    %503 = vmatprep.subr.mxu0 0.0
    %504 = vmatpush2.msra.mxu0 0.0
    %505 = vmatprep.subr.mxu0 0.0
    %506 = vmatpush2.msra.mxu0 0.0
    %507 = vmatprep.subr.mxu0 0.0
    %508 = vmatpush2.msra.mxu0 0.0
    %509 = vmatprep.mubr.f32.mxu0 0.0
    %510 = vmatmul.mubr.f32.gmra.mxu0 %v443
    %v511 = vpop.f32.mrf.mxu0
    %v512 = vadd.f32 0.0, %v511
    %v513 = vpop.f32.mrf.mxu0
    %514 = vdwg.mxu0
    %515 = vmatprep.subr.mxu0 0.0
    %516 = vmatpush1.msra.mxu0 0.0
    %517 = vmatprep.subr.mxu0 0.0
    %518 = vmatpush1.msra.mxu0 0.0
    %519 = vmatprep.subr.mxu0 0.0
    %520 = vmatpush1.msra.mxu0 0.0
    %521 = vmatprep.subr.mxu0 0.0
    %522 = vmatpush1.msra.mxu0 0.0
    %523 = vmatprep.subr.mxu0 0.0
    %524 = vmatpush1.msra.mxu0 0.0
    %525 = vmatprep.subr.mxu0 0.0
    %526 = vmatpush1.msra.mxu0 0.0
    %527 = vmatprep.subr.mxu0 0.0
    %528 = vmatpush1.msra.mxu0 0.0
    %529 = vmatprep.subr.mxu0 0.0
    %530 = vmatpush1.msra.mxu0 0.0
    %531 = vmatprep.subr.mxu0 0.0
    %532 = vmatpush1.msra.mxu0 0.0
    %533 = vmatprep.subr.mxu0 0.0
    %534 = vmatpush1.msra.mxu0 0.0
    %535 = vmatprep.subr.mxu0 0.0
    %536 = vmatpush1.msra.mxu0 0.0
    %537 = vmatprep.subr.mxu0 0.0
    %538 = vmatpush1.msra.mxu0 0.0
    %539 = vmatprep.subr.mxu0 0.0
    %540 = vmatpush1.msra.mxu0 0.0
    %541 = vmatprep.subr.mxu0 0.0
    %542 = vmatpush1.msra.mxu0 0.0
    %543 = vmatprep.subr.mxu0 0.0
    %544 = vmatpush1.msra.mxu0 %v437
    %545 = vmatprep.subr.mxu0 0.0
    %546 = vmatpush1.msra.mxu0 %v436
    %547 = vmatprep.subr.mxu0 0.0
    %548 = vmatpush2.msra.mxu0 0.0
    %549 = vmatprep.subr.mxu0 0.0
    %550 = vmatpush2.msra.mxu0 0.0
    %551 = vmatprep.subr.mxu0 0.0
    %552 = vmatpush2.msra.mxu0 0.0
    %553 = vmatprep.subr.mxu0 0.0
    %554 = vmatpush2.msra.mxu0 0.0
    %555 = vmatprep.subr.mxu0 0.0
    %556 = vmatpush2.msra.mxu0 0.0
    %557 = vmatprep.subr.mxu0 0.0
    %558 = vmatpush2.msra.mxu0 0.0
    %559 = vmatprep.subr.mxu0 0.0
    %560 = vmatpush2.msra.mxu0 0.0
    %561 = vmatprep.subr.mxu0 0.0
    %562 = vmatpush2.msra.mxu0 0.0
    %563 = vmatprep.subr.mxu0 0.0
    %564 = vmatpush2.msra.mxu0 0.0
    %565 = vmatprep.subr.mxu0 0.0
    %566 = vmatpush2.msra.mxu0 0.0
    %567 = vmatprep.subr.mxu0 0.0
    %568 = vmatpush2.msra.mxu0 0.0
    %569 = vmatprep.subr.mxu0 0.0
    %570 = vmatpush2.msra.mxu0 0.0
    %571 = vmatprep.subr.mxu0 0.0
    %572 = vmatpush2.msra.mxu0 0.0
    %573 = vmatprep.subr.mxu0 0.0
    %574 = vmatpush2.msra.mxu0 0.0
    %575 = vmatprep.subr.mxu0 0.0
    %576 = vmatpush2.msra.mxu0 0.0
    %577 = vmatprep.subr.mxu0 0.0
    %578 = vmatpush2.msra.mxu0 0.0
    %579 = vmatprep.mubr.f32.mxu0 0.0
    %580 = vmatmul.mubr.f32.gmra.mxu0 %v443
    %v581 = vpop.f32.mrf.mxu0
    %v582 = vadd.f32 0.0, %v581
    %v583 = vpop.f32.mrf.mxu0
    %584 = vdwg.mxu0
    %v586 = vsel %vm232, %v429, 0
    %v589 = vsel %vm239, %v582, 0
    %591 = vmatprep.subr.mxu0 0.0
    %592 = vmatpush1.msra.mxu0 0.0
    %593 = vmatprep.subr.mxu0 0.0
    %594 = vmatpush1.msra.mxu0 0.0
    %595 = vmatprep.subr.mxu0 0.0
    %596 = vmatpush1.msra.mxu0 0.0
    %597 = vmatprep.subr.mxu0 0.0
    %598 = vmatpush1.msra.mxu0 0.0
    %599 = vmatprep.subr.mxu0 0.0
    %600 = vmatpush1.msra.mxu0 0.0
    %601 = vmatprep.subr.mxu0 0.0
    %602 = vmatpush1.msra.mxu0 0.0
    %603 = vmatprep.subr.mxu0 0.0
    %604 = vmatpush1.msra.mxu0 0.0
    %605 = vmatprep.subr.mxu0 0.0
    %606 = vmatpush1.msra.mxu0 0.0
    %607 = vmatprep.subr.mxu0 0.0
    %608 = vmatpush1.msra.mxu0 0.0
    %609 = vmatprep.subr.mxu0 0.0
    %610 = vmatpush1.msra.mxu0 0.0
    %611 = vmatprep.subr.mxu0 0.0
    %612 = vmatpush1.msra.mxu0 0.0
    %613 = vmatprep.subr.mxu0 0.0
    %614 = vmatpush1.msra.mxu0 0.0
    %615 = vmatprep.subr.mxu0 0.0
    %616 = vmatpush1.msra.mxu0 0.0
    %617 = vmatprep.subr.mxu0 0.0
    %618 = vmatpush1.msra.mxu0 0.0
    %619 = vmatprep.subr.mxu0 0.0
    %620 = vmatpush1.msra.mxu0 0.0
    %621 = vmatprep.subr.mxu0 0.0
    %622 = vmatpush1.msra.mxu0 %v589
    %623 = vmatprep.subr.mxu0 0.0
    %624 = vmatpush2.msra.mxu0 0.0
    %625 = vmatprep.subr.mxu0 0.0
    %626 = vmatpush2.msra.mxu0 0.0
    %627 = vmatprep.subr.mxu0 0.0
    %628 = vmatpush2.msra.mxu0 0.0
    %629 = vmatprep.subr.mxu0 0.0
    %630 = vmatpush2.msra.mxu0 0.0
    %631 = vmatprep.subr.mxu0 0.0
    %632 = vmatpush2.msra.mxu0 0.0
    %633 = vmatprep.subr.mxu0 0.0
    %634 = vmatpush2.msra.mxu0 0.0
    %635 = vmatprep.subr.mxu0 0.0
    %636 = vmatpush2.msra.mxu0 0.0
    %637 = vmatprep.subr.mxu0 0.0
    %638 = vmatpush2.msra.mxu0 0.0
    %639 = vmatprep.subr.mxu0 0.0
    %640 = vmatpush2.msra.mxu0 0.0
    %641 = vmatprep.subr.mxu0 0.0
    %642 = vmatpush2.msra.mxu0 0.0
    %643 = vmatprep.subr.mxu0 0.0
    %644 = vmatpush2.msra.mxu0 0.0
    %645 = vmatprep.subr.mxu0 0.0
    %646 = vmatpush2.msra.mxu0 0.0
    %647 = vmatprep.subr.mxu0 0.0
    %648 = vmatpush2.msra.mxu0 0.0
    %649 = vmatprep.subr.mxu0 0.0
    %650 = vmatpush2.msra.mxu0 0.0
    %651 = vmatprep.subr.mxu0 0.0
    %652 = vmatpush2.msra.mxu0 0.0
    %653 = vmatprep.subr.mxu0 0.0
    %654 = vmatpush2.msra.mxu0 0.0
    %655 = vmatprep.mubr.f32.mxu0 0.0
    %656 = vmatmul.mubr.f32.gmra.mxu0 %v586
    %v657 = vpop.f32.mrf.mxu0
    %v658 = vadd.f32 0.0, %v657
    %v659 = vpop.f32.mrf.mxu0
    %660 = vdwg.mxu0
    %v662 = vsel %vm232, %v428, 0
    %v665 = vsel %vm239, %v512, 0
    %667 = vmatprep.subr.mxu0 0.0
    %668 = vmatpush1.msra.mxu0 0.0
    %669 = vmatprep.subr.mxu0 0.0
    %670 = vmatpush1.msra.mxu0 0.0
    %671 = vmatprep.subr.mxu0 0.0
    %672 = vmatpush1.msra.mxu0 0.0
    %673 = vmatprep.subr.mxu0 0.0
    %674 = vmatpush1.msra.mxu0 0.0
    %675 = vmatprep.subr.mxu0 0.0
    %676 = vmatpush1.msra.mxu0 0.0
    %677 = vmatprep.subr.mxu0 0.0
    %678 = vmatpush1.msra.mxu0 0.0
    %679 = vmatprep.subr.mxu0 0.0
    %680 = vmatpush1.msra.mxu0 0.0
    %681 = vmatprep.subr.mxu0 0.0
    %682 = vmatpush1.msra.mxu0 0.0
    %683 = vmatprep.subr.mxu0 0.0
    %684 = vmatpush1.msra.mxu0 0.0
    %685 = vmatprep.subr.mxu0 0.0
    %686 = vmatpush1.msra.mxu0 0.0
    %687 = vmatprep.subr.mxu0 0.0
    %688 = vmatpush1.msra.mxu0 0.0
    %689 = vmatprep.subr.mxu0 0.0
    %690 = vmatpush1.msra.mxu0 0.0
    %691 = vmatprep.subr.mxu0 0.0
    %692 = vmatpush1.msra.mxu0 0.0
    %693 = vmatprep.subr.mxu0 0.0
    %694 = vmatpush1.msra.mxu0 0.0
    %695 = vmatprep.subr.mxu0 0.0
    %696 = vmatpush1.msra.mxu0 0.0
    %697 = vmatprep.subr.mxu0 0.0
    %698 = vmatpush1.msra.mxu0 %v665
    %699 = vmatprep.subr.mxu0 0.0
    %700 = vmatpush2.msra.mxu0 0.0
    %701 = vmatprep.subr.mxu0 0.0
    %702 = vmatpush2.msra.mxu0 0.0
    %703 = vmatprep.subr.mxu0 0.0
    %704 = vmatpush2.msra.mxu0 0.0
    %705 = vmatprep.subr.mxu0 0.0
    %706 = vmatpush2.msra.mxu0 0.0
    %707 = vmatprep.subr.mxu0 0.0
    %708 = vmatpush2.msra.mxu0 0.0
    %709 = vmatprep.subr.mxu0 0.0
    %710 = vmatpush2.msra.mxu0 0.0
    %711 = vmatprep.subr.mxu0 0.0
    %712 = vmatpush2.msra.mxu0 0.0
    %713 = vmatprep.subr.mxu0 0.0
    %714 = vmatpush2.msra.mxu0 0.0
    %715 = vmatprep.subr.mxu0 0.0
    %716 = vmatpush2.msra.mxu0 0.0
    %717 = vmatprep.subr.mxu0 0.0
    %718 = vmatpush2.msra.mxu0 0.0
    %719 = vmatprep.subr.mxu0 0.0
    %720 = vmatpush2.msra.mxu0 0.0
    %721 = vmatprep.subr.mxu0 0.0
    %722 = vmatpush2.msra.mxu0 0.0
    %723 = vmatprep.subr.mxu0 0.0
    %724 = vmatpush2.msra.mxu0 0.0
    %725 = vmatprep.subr.mxu0 0.0
    %726 = vmatpush2.msra.mxu0 0.0
    %727 = vmatprep.subr.mxu0 0.0
    %728 = vmatpush2.msra.mxu0 0.0
    %729 = vmatprep.subr.mxu0 0.0
    %730 = vmatpush2.msra.mxu0 0.0
    %731 = vmatprep.mubr.f32.mxu0 0.0
    %732 = vmatmul.mubr.f32.gmra.mxu0 %v662
    %v733 = vpop.f32.mrf.mxu0
    %v734 = vadd.f32 %v658, %v733
    %v735 = vpop.f32.mrf.mxu0
    %736 = vdwg.mxu0
    %738 = vset.pattern.permute.xlu0 0
    %739 = vperm.xlu0 %738, %v432
    %v740 = vpop.permute.xlu0 %739
    %v742 = vadd.f32 %v734, %v740
    %v744 = vsel %vm232, %v431, 0
    %746 = vmatprep.subr.mxu0 0.0
    %747 = vmatpush1.msra.mxu0 0.0
    %748 = vmatprep.subr.mxu0 0.0
    %749 = vmatpush1.msra.mxu0 0.0
    %750 = vmatprep.subr.mxu0 0.0
    %751 = vmatpush1.msra.mxu0 0.0
    %752 = vmatprep.subr.mxu0 0.0
    %753 = vmatpush1.msra.mxu0 0.0
    %754 = vmatprep.subr.mxu0 0.0
    %755 = vmatpush1.msra.mxu0 0.0
    %756 = vmatprep.subr.mxu0 0.0
    %757 = vmatpush1.msra.mxu0 0.0
    %758 = vmatprep.subr.mxu0 0.0
    %759 = vmatpush1.msra.mxu0 0.0
    %760 = vmatprep.subr.mxu0 0.0
    %761 = vmatpush1.msra.mxu0 0.0
    %762 = vmatprep.subr.mxu0 0.0
    %763 = vmatpush1.msra.mxu0 0.0
    %764 = vmatprep.subr.mxu0 0.0
    %765 = vmatpush1.msra.mxu0 0.0
    %766 = vmatprep.subr.mxu0 0.0
    %767 = vmatpush1.msra.mxu0 0.0
    %768 = vmatprep.subr.mxu0 0.0
    %769 = vmatpush1.msra.mxu0 0.0
    %770 = vmatprep.subr.mxu0 0.0
    %771 = vmatpush1.msra.mxu0 0.0
    %772 = vmatprep.subr.mxu0 0.0
    %773 = vmatpush1.msra.mxu0 0.0
    %774 = vmatprep.subr.mxu0 0.0
    %775 = vmatpush1.msra.mxu0 0.0
    %776 = vmatprep.subr.mxu0 0.0
    %777 = vmatpush1.msra.mxu0 %v589
    %778 = vmatprep.subr.mxu0 0.0
    %779 = vmatpush2.msra.mxu0 0.0
    %780 = vmatprep.subr.mxu0 0.0
    %781 = vmatpush2.msra.mxu0 0.0
    %782 = vmatprep.subr.mxu0 0.0
    %783 = vmatpush2.msra.mxu0 0.0
    %784 = vmatprep.subr.mxu0 0.0
    %785 = vmatpush2.msra.mxu0 0.0
    %786 = vmatprep.subr.mxu0 0.0
    %787 = vmatpush2.msra.mxu0 0.0
    %788 = vmatprep.subr.mxu0 0.0
    %789 = vmatpush2.msra.mxu0 0.0
    %790 = vmatprep.subr.mxu0 0.0
    %791 = vmatpush2.msra.mxu0 0.0
    %792 = vmatprep.subr.mxu0 0.0
    %793 = vmatpush2.msra.mxu0 0.0
    %794 = vmatprep.subr.mxu0 0.0
    %795 = vmatpush2.msra.mxu0 0.0
    %796 = vmatprep.subr.mxu0 0.0
    %797 = vmatpush2.msra.mxu0 0.0
    %798 = vmatprep.subr.mxu0 0.0
    %799 = vmatpush2.msra.mxu0 0.0
    %800 = vmatprep.subr.mxu0 0.0
    %801 = vmatpush2.msra.mxu0 0.0
    %802 = vmatprep.subr.mxu0 0.0
    %803 = vmatpush2.msra.mxu0 0.0
    %804 = vmatprep.subr.mxu0 0.0
    %805 = vmatpush2.msra.mxu0 0.0
    %806 = vmatprep.subr.mxu0 0.0
    %807 = vmatpush2.msra.mxu0 0.0
    %808 = vmatprep.subr.mxu0 0.0
    %809 = vmatpush2.msra.mxu0 0.0
    %810 = vmatprep.mubr.f32.mxu0 0.0
    %811 = vmatmul.mubr.f32.gmra.mxu0 %v744
    %v812 = vpop.f32.mrf.mxu0
    %v813 = vadd.f32 0.0, %v812
    %v814 = vpop.f32.mrf.mxu0
    %815 = vdwg.mxu0
    %v817 = vsel %vm232, %v430, 0
    %819 = vmatprep.subr.mxu0 0.0
    %820 = vmatpush1.msra.mxu0 0.0
    %821 = vmatprep.subr.mxu0 0.0
    %822 = vmatpush1.msra.mxu0 0.0
    %823 = vmatprep.subr.mxu0 0.0
    %824 = vmatpush1.msra.mxu0 0.0
    %825 = vmatprep.subr.mxu0 0.0
    %826 = vmatpush1.msra.mxu0 0.0
    %827 = vmatprep.subr.mxu0 0.0
    %828 = vmatpush1.msra.mxu0 0.0
    %829 = vmatprep.subr.mxu0 0.0
    %830 = vmatpush1.msra.mxu0 0.0
    %831 = vmatprep.subr.mxu0 0.0
    %832 = vmatpush1.msra.mxu0 0.0
    %833 = vmatprep.subr.mxu0 0.0
    %834 = vmatpush1.msra.mxu0 0.0
    %835 = vmatprep.subr.mxu0 0.0
    %836 = vmatpush1.msra.mxu0 0.0
    %837 = vmatprep.subr.mxu0 0.0
    %838 = vmatpush1.msra.mxu0 0.0
    %839 = vmatprep.subr.mxu0 0.0
    %840 = vmatpush1.msra.mxu0 0.0
    %841 = vmatprep.subr.mxu0 0.0
    %842 = vmatpush1.msra.mxu0 0.0
    %843 = vmatprep.subr.mxu0 0.0
    %844 = vmatpush1.msra.mxu0 0.0
    %845 = vmatprep.subr.mxu0 0.0
    %846 = vmatpush1.msra.mxu0 0.0
    %847 = vmatprep.subr.mxu0 0.0
    %848 = vmatpush1.msra.mxu0 0.0
    %849 = vmatprep.subr.mxu0 0.0
    %850 = vmatpush1.msra.mxu0 %v665
    %851 = vmatprep.subr.mxu0 0.0
    %852 = vmatpush2.msra.mxu0 0.0
    %853 = vmatprep.subr.mxu0 0.0
    %854 = vmatpush2.msra.mxu0 0.0
    %855 = vmatprep.subr.mxu0 0.0
    %856 = vmatpush2.msra.mxu0 0.0
    %857 = vmatprep.subr.mxu0 0.0
    %858 = vmatpush2.msra.mxu0 0.0
    %859 = vmatprep.subr.mxu0 0.0
    %860 = vmatpush2.msra.mxu0 0.0
    %861 = vmatprep.subr.mxu0 0.0
    %862 = vmatpush2.msra.mxu0 0.0
    %863 = vmatprep.subr.mxu0 0.0
    %864 = vmatpush2.msra.mxu0 0.0
    %865 = vmatprep.subr.mxu0 0.0
    %866 = vmatpush2.msra.mxu0 0.0
    %867 = vmatprep.subr.mxu0 0.0
    %868 = vmatpush2.msra.mxu0 0.0
    %869 = vmatprep.subr.mxu0 0.0
    %870 = vmatpush2.msra.mxu0 0.0
    %871 = vmatprep.subr.mxu0 0.0
    %872 = vmatpush2.msra.mxu0 0.0
    %873 = vmatprep.subr.mxu0 0.0
    %874 = vmatpush2.msra.mxu0 0.0
    %875 = vmatprep.subr.mxu0 0.0
    %876 = vmatpush2.msra.mxu0 0.0
    %877 = vmatprep.subr.mxu0 0.0
    %878 = vmatpush2.msra.mxu0 0.0
    %879 = vmatprep.subr.mxu0 0.0
    %880 = vmatpush2.msra.mxu0 0.0
    %881 = vmatprep.subr.mxu0 0.0
    %882 = vmatpush2.msra.mxu0 0.0
    %883 = vmatprep.mubr.f32.mxu0 0.0
    %884 = vmatmul.mubr.f32.gmra.mxu0 %v817
    %v885 = vpop.f32.mrf.mxu0
    %v886 = vadd.f32 %v813, %v885
    %v887 = vpop.f32.mrf.mxu0
    %888 = vdwg.mxu0
    %890 = vset.pattern.permute.xlu0 0
    %891 = vperm.xlu0 %890, %v433
    %v892 = vpop.permute.xlu0 %891
    %v894 = vadd.f32 %v886, %v892
    %vm895 = vcmask 68608
    %v896 = vsel %vm895, %v742, 0.0
    %897 = vadd.xlane.f32.xlu0 %v896
    %v898 = vpop.xlane.xlu0 %897
    %v899 = vrcp.pop 9.0
    %v900 = vmul.f32 %v898, %v899
    %v901 = vsub.f32 %v742, %v900
    %v902 = vmul.f32 %v901, %v901
    %v903 = vsel %vm895, %v902, 0.0
    %904 = vadd.xlane.f32.xlu0 %v903
    %v905 = vpop.xlane.xlu0 %904
    %v906 = vmul.f32 %v905, %v899
    %v907 = vadd.f32 %v906, 1e-05
    %v908 = vrsqrt.pop %v907
    %v909 = vmul.f32 %v901, %v908
    %v910 = vmul.f32 %v909, 0.5
    %v911 = vmul.f32 %v909, 0.70710677
    %v912 = verf.f32.pop %v911
    %v913 = vadd.f32 %v912, 1.0
    %v914 = vmul.f32 %v910, %v913
    %v915 = vsel %vm895, %v894, 0.0
    %916 = vadd.xlane.f32.xlu0 %v915
    %v917 = vpop.xlane.xlu0 %916
    %v918 = vmul.f32 %v917, %v899
    %v919 = vsub.f32 %v894, %v918
    %v920 = vmul.f32 %v919, %v919
    %v921 = vsel %vm895, %v920, 0.0
    %922 = vadd.xlane.f32.xlu0 %v921
    %v923 = vpop.xlane.xlu0 %922
    %v924 = vmul.f32 %v923, %v899
    %v925 = vadd.f32 %v924, 1e-05
    %v926 = vrsqrt.pop %v925
    %v927 = vmul.f32 %v919, %v926
    %v928 = vmul.f32 %v927, 0.5
    %v929 = vmul.f32 %v927, 0.70710677
    %v930 = verf.f32.pop %v929
    %v931 = vadd.f32 %v930, 1.0
    %v932 = vmul.f32 %v928, %v931
    %vm933 = vcmask 72704
    %v935 = vsel %vm933, %v932, 0
    %vm937 = vcmask 1040384
    %v939 = vsel %vm937, %v441, 0
    %941 = vmatprep.subr.mxu0 0.0
    %942 = vmatpush1.msra.mxu0 0.0
    %943 = vmatprep.subr.mxu0 0.0
    %944 = vmatpush1.msra.mxu0 0.0
    %945 = vmatprep.subr.mxu0 0.0
    %946 = vmatpush1.msra.mxu0 0.0
    %947 = vmatprep.subr.mxu0 0.0
    %948 = vmatpush1.msra.mxu0 0.0
    %949 = vmatprep.subr.mxu0 0.0
    %950 = vmatpush1.msra.mxu0 0.0
    %951 = vmatprep.subr.mxu0 0.0
    %952 = vmatpush1.msra.mxu0 0.0
    %953 = vmatprep.subr.mxu0 0.0
    %954 = vmatpush1.msra.mxu0 0.0
    %955 = vmatprep.subr.mxu0 0.0
    %956 = vmatpush1.msra.mxu0 0.0
    %957 = vmatprep.subr.mxu0 0.0
    %958 = vmatpush1.msra.mxu0 0.0
    %959 = vmatprep.subr.mxu0 0.0
    %960 = vmatpush1.msra.mxu0 0.0
    %961 = vmatprep.subr.mxu0 0.0
    %962 = vmatpush1.msra.mxu0 0.0
    %963 = vmatprep.subr.mxu0 0.0
    %964 = vmatpush1.msra.mxu0 0.0
    %965 = vmatprep.subr.mxu0 0.0
    %966 = vmatpush1.msra.mxu0 0.0
    %967 = vmatprep.subr.mxu0 0.0
    %968 = vmatpush1.msra.mxu0 0.0
    %969 = vmatprep.subr.mxu0 0.0
    %970 = vmatpush1.msra.mxu0 %v939
    %971 = vmatprep.subr.mxu0 0.0
    %972 = vmatpush1.msra.mxu0 %v440
    %973 = vmatprep.subr.mxu0 0.0
    %974 = vmatpush2.msra.mxu0 0.0
    %975 = vmatprep.subr.mxu0 0.0
    %976 = vmatpush2.msra.mxu0 0.0
    %977 = vmatprep.subr.mxu0 0.0
    %978 = vmatpush2.msra.mxu0 0.0
    %979 = vmatprep.subr.mxu0 0.0
    %980 = vmatpush2.msra.mxu0 0.0
    %981 = vmatprep.subr.mxu0 0.0
    %982 = vmatpush2.msra.mxu0 0.0
    %983 = vmatprep.subr.mxu0 0.0
    %984 = vmatpush2.msra.mxu0 0.0
    %985 = vmatprep.subr.mxu0 0.0
    %986 = vmatpush2.msra.mxu0 0.0
    %987 = vmatprep.subr.mxu0 0.0
    %988 = vmatpush2.msra.mxu0 0.0
    %989 = vmatprep.subr.mxu0 0.0
    %990 = vmatpush2.msra.mxu0 0.0
    %991 = vmatprep.subr.mxu0 0.0
    %992 = vmatpush2.msra.mxu0 0.0
    %993 = vmatprep.subr.mxu0 0.0
    %994 = vmatpush2.msra.mxu0 0.0
    %995 = vmatprep.subr.mxu0 0.0
    %996 = vmatpush2.msra.mxu0 0.0
    %997 = vmatprep.subr.mxu0 0.0
    %998 = vmatpush2.msra.mxu0 0.0
    %999 = vmatprep.subr.mxu0 0.0
    %1000 = vmatpush2.msra.mxu0 0.0
    %1001 = vmatprep.subr.mxu0 0.0
    %1002 = vmatpush2.msra.mxu0 0.0
    %1003 = vmatprep.subr.mxu0 0.0
    %1004 = vmatpush2.msra.mxu0 0.0
    %1005 = vmatprep.mubr.f32.mxu0 0.0
    %1006 = vmatmul.mubr.f32.gmra.mxu0 %v935
    %v1007 = vpop.f32.mrf.mxu0
    %v1008 = vadd.f32 0.0, %v1007
    %v1009 = vpop.f32.mrf.mxu0
    %1010 = vdwg.mxu0
    %v1012 = vsel %vm933, %v914, 0
    %v1015 = vsel %vm937, %v439, 0
    %1017 = vmatprep.subr.mxu0 0.0
    %1018 = vmatpush1.msra.mxu0 0.0
    %1019 = vmatprep.subr.mxu0 0.0
    %1020 = vmatpush1.msra.mxu0 0.0
    %1021 = vmatprep.subr.mxu0 0.0
    %1022 = vmatpush1.msra.mxu0 0.0
    %1023 = vmatprep.subr.mxu0 0.0
    %1024 = vmatpush1.msra.mxu0 0.0
    %1025 = vmatprep.subr.mxu0 0.0
    %1026 = vmatpush1.msra.mxu0 0.0
    %1027 = vmatprep.subr.mxu0 0.0
    %1028 = vmatpush1.msra.mxu0 0.0
    %1029 = vmatprep.subr.mxu0 0.0
    %1030 = vmatpush1.msra.mxu0 0.0
    %1031 = vmatprep.subr.mxu0 0.0
    %1032 = vmatpush1.msra.mxu0 0.0
    %1033 = vmatprep.subr.mxu0 0.0
    %1034 = vmatpush1.msra.mxu0 0.0
    %1035 = vmatprep.subr.mxu0 0.0
    %1036 = vmatpush1.msra.mxu0 0.0
    %1037 = vmatprep.subr.mxu0 0.0
    %1038 = vmatpush1.msra.mxu0 0.0
    %1039 = vmatprep.subr.mxu0 0.0
    %1040 = vmatpush1.msra.mxu0 0.0
    %1041 = vmatprep.subr.mxu0 0.0
    %1042 = vmatpush1.msra.mxu0 0.0
    %1043 = vmatprep.subr.mxu0 0.0
    %1044 = vmatpush1.msra.mxu0 0.0
    %1045 = vmatprep.subr.mxu0 0.0
    %1046 = vmatpush1.msra.mxu0 %v1015
    %1047 = vmatprep.subr.mxu0 0.0
    %1048 = vmatpush1.msra.mxu0 %v438
    %1049 = vmatprep.subr.mxu0 0.0
    %1050 = vmatpush2.msra.mxu0 0.0
    %1051 = vmatprep.subr.mxu0 0.0
    %1052 = vmatpush2.msra.mxu0 0.0
    %1053 = vmatprep.subr.mxu0 0.0
    %1054 = vmatpush2.msra.mxu0 0.0
    %1055 = vmatprep.subr.mxu0 0.0
    %1056 = vmatpush2.msra.mxu0 0.0
    %1057 = vmatprep.subr.mxu0 0.0
    %1058 = vmatpush2.msra.mxu0 0.0
    %1059 = vmatprep.subr.mxu0 0.0
    %1060 = vmatpush2.msra.mxu0 0.0
    %1061 = vmatprep.subr.mxu0 0.0
    %1062 = vmatpush2.msra.mxu0 0.0
    %1063 = vmatprep.subr.mxu0 0.0
    %1064 = vmatpush2.msra.mxu0 0.0
    %1065 = vmatprep.subr.mxu0 0.0
    %1066 = vmatpush2.msra.mxu0 0.0
    %1067 = vmatprep.subr.mxu0 0.0
    %1068 = vmatpush2.msra.mxu0 0.0
    %1069 = vmatprep.subr.mxu0 0.0
    %1070 = vmatpush2.msra.mxu0 0.0
    %1071 = vmatprep.subr.mxu0 0.0
    %1072 = vmatpush2.msra.mxu0 0.0
    %1073 = vmatprep.subr.mxu0 0.0
    %1074 = vmatpush2.msra.mxu0 0.0
    %1075 = vmatprep.subr.mxu0 0.0
    %1076 = vmatpush2.msra.mxu0 0.0
    %1077 = vmatprep.subr.mxu0 0.0
    %1078 = vmatpush2.msra.mxu0 0.0
    %1079 = vmatprep.subr.mxu0 0.0
    %1080 = vmatpush2.msra.mxu0 0.0
    %1081 = vmatprep.mubr.f32.mxu0 0.0
    %1082 = vmatmul.mubr.f32.gmra.mxu0 %v1012
    %v1083 = vpop.f32.mrf.mxu0
    %v1084 = vadd.f32 %v1008, %v1083
    %v1085 = vpop.f32.mrf.mxu0
    %1086 = vdwg.mxu0
    %v1087 = vld [vmem:[#allocation19] sm:$0xf]
    %v1088 = vld [vmem:[#allocation20] sm:$0xf]
    %1089 = vrot.lane.b32.xlu0 %v427, 120
    %v1090 = vpop.permute.xlu0 %1089
    %v1092 = vsel %vm232, %v1088, 0
    %v1094 = vsel %vm239, %v1090, 0
    %1096 = vmatprep.subr.mxu0 0.0
    %1097 = vmatpush1.msra.mxu0 0.0
    %1098 = vmatprep.subr.mxu0 0.0
    %1099 = vmatpush1.msra.mxu0 0.0
    %1100 = vmatprep.subr.mxu0 0.0
    %1101 = vmatpush1.msra.mxu0 0.0
    %1102 = vmatprep.subr.mxu0 0.0
    %1103 = vmatpush1.msra.mxu0 0.0
    %1104 = vmatprep.subr.mxu0 0.0
    %1105 = vmatpush1.msra.mxu0 0.0
    %1106 = vmatprep.subr.mxu0 0.0
    %1107 = vmatpush1.msra.mxu0 0.0
    %1108 = vmatprep.subr.mxu0 0.0
    %1109 = vmatpush1.msra.mxu0 0.0
    %1110 = vmatprep.subr.mxu0 0.0
    %1111 = vmatpush1.msra.mxu0 0.0
    %1112 = vmatprep.subr.mxu0 0.0
    %1113 = vmatpush1.msra.mxu0 0.0
    %1114 = vmatprep.subr.mxu0 0.0
    %1115 = vmatpush1.msra.mxu0 0.0
    %1116 = vmatprep.subr.mxu0 0.0
    %1117 = vmatpush1.msra.mxu0 0.0
    %1118 = vmatprep.subr.mxu0 0.0
    %1119 = vmatpush1.msra.mxu0 0.0
    %1120 = vmatprep.subr.mxu0 0.0
    %1121 = vmatpush1.msra.mxu0 0.0
    %1122 = vmatprep.subr.mxu0 0.0
    %1123 = vmatpush1.msra.mxu0 0.0
    %1124 = vmatprep.subr.mxu0 0.0
    %1125 = vmatpush1.msra.mxu0 0.0
    %1126 = vmatprep.subr.mxu0 0.0
    %1127 = vmatpush1.msra.mxu0 %v1094
    %1128 = vmatprep.subr.mxu0 0.0
    %1129 = vmatpush2.msra.mxu0 0.0
    %1130 = vmatprep.subr.mxu0 0.0
    %1131 = vmatpush2.msra.mxu0 0.0
    %1132 = vmatprep.subr.mxu0 0.0
    %1133 = vmatpush2.msra.mxu0 0.0
    %1134 = vmatprep.subr.mxu0 0.0
    %1135 = vmatpush2.msra.mxu0 0.0
    %1136 = vmatprep.subr.mxu0 0.0
    %1137 = vmatpush2.msra.mxu0 0.0
    %1138 = vmatprep.subr.mxu0 0.0
    %1139 = vmatpush2.msra.mxu0 0.0
    %1140 = vmatprep.subr.mxu0 0.0
    %1141 = vmatpush2.msra.mxu0 0.0
    %1142 = vmatprep.subr.mxu0 0.0
    %1143 = vmatpush2.msra.mxu0 0.0
    %1144 = vmatprep.subr.mxu0 0.0
    %1145 = vmatpush2.msra.mxu0 0.0
    %1146 = vmatprep.subr.mxu0 0.0
    %1147 = vmatpush2.msra.mxu0 0.0
    %1148 = vmatprep.subr.mxu0 0.0
    %1149 = vmatpush2.msra.mxu0 0.0
    %1150 = vmatprep.subr.mxu0 0.0
    %1151 = vmatpush2.msra.mxu0 0.0
    %1152 = vmatprep.subr.mxu0 0.0
    %1153 = vmatpush2.msra.mxu0 0.0
    %1154 = vmatprep.subr.mxu0 0.0
    %1155 = vmatpush2.msra.mxu0 0.0
    %1156 = vmatprep.subr.mxu0 0.0
    %1157 = vmatpush2.msra.mxu0 0.0
    %1158 = vmatprep.subr.mxu0 0.0
    %1159 = vmatpush2.msra.mxu0 0.0
    %1160 = vmatprep.mubr.f32.mxu0 0.0
    %1161 = vmatmul.mubr.f32.gmra.mxu0 %v1092
    %v1162 = vpop.f32.mrf.mxu0
    %v1163 = vadd.f32 0.0, %v1162
    %v1164 = vpop.f32.mrf.mxu0
    %1165 = vdwg.mxu0
    %v1167 = vsel %vm232, %v1087, 0
    %v1169 = vsel %vm239, %v427, 0
    %1171 = vmatprep.subr.mxu0 0.0
    %1172 = vmatpush1.msra.mxu0 0.0
    %1173 = vmatprep.subr.mxu0 0.0
    %1174 = vmatpush1.msra.mxu0 0.0
    %1175 = vmatprep.subr.mxu0 0.0
    %1176 = vmatpush1.msra.mxu0 0.0
    %1177 = vmatprep.subr.mxu0 0.0
    %1178 = vmatpush1.msra.mxu0 0.0
    %1179 = vmatprep.subr.mxu0 0.0
    %1180 = vmatpush1.msra.mxu0 0.0
    %1181 = vmatprep.subr.mxu0 0.0
    %1182 = vmatpush1.msra.mxu0 0.0
    %1183 = vmatprep.subr.mxu0 0.0
    %1184 = vmatpush1.msra.mxu0 0.0
    %1185 = vmatprep.subr.mxu0 0.0
    %1186 = vmatpush1.msra.mxu0 0.0
    %1187 = vmatprep.subr.mxu0 0.0
    %1188 = vmatpush1.msra.mxu0 0.0
    %1189 = vmatprep.subr.mxu0 0.0
    %1190 = vmatpush1.msra.mxu0 0.0
    %1191 = vmatprep.subr.mxu0 0.0
    %1192 = vmatpush1.msra.mxu0 0.0
    %1193 = vmatprep.subr.mxu0 0.0
    %1194 = vmatpush1.msra.mxu0 0.0
    %1195 = vmatprep.subr.mxu0 0.0
    %1196 = vmatpush1.msra.mxu0 0.0
    %1197 = vmatprep.subr.mxu0 0.0
    %1198 = vmatpush1.msra.mxu0 0.0
    %1199 = vmatprep.subr.mxu0 0.0
    %1200 = vmatpush1.msra.mxu0 0.0
    %1201 = vmatprep.subr.mxu0 0.0
    %1202 = vmatpush1.msra.mxu0 %v1169
    %1203 = vmatprep.subr.mxu0 0.0
    %1204 = vmatpush2.msra.mxu0 0.0
    %1205 = vmatprep.subr.mxu0 0.0
    %1206 = vmatpush2.msra.mxu0 0.0
    %1207 = vmatprep.subr.mxu0 0.0
    %1208 = vmatpush2.msra.mxu0 0.0
    %1209 = vmatprep.subr.mxu0 0.0
    %1210 = vmatpush2.msra.mxu0 0.0
    %1211 = vmatprep.subr.mxu0 0.0
    %1212 = vmatpush2.msra.mxu0 0.0
    %1213 = vmatprep.subr.mxu0 0.0
    %1214 = vmatpush2.msra.mxu0 0.0
    %1215 = vmatprep.subr.mxu0 0.0
    %1216 = vmatpush2.msra.mxu0 0.0
    %1217 = vmatprep.subr.mxu0 0.0
    %1218 = vmatpush2.msra.mxu0 0.0
    %1219 = vmatprep.subr.mxu0 0.0
    %1220 = vmatpush2.msra.mxu0 0.0
    %1221 = vmatprep.subr.mxu0 0.0
    %1222 = vmatpush2.msra.mxu0 0.0
    %1223 = vmatprep.subr.mxu0 0.0
    %1224 = vmatpush2.msra.mxu0 0.0
    %1225 = vmatprep.subr.mxu0 0.0
    %1226 = vmatpush2.msra.mxu0 0.0
    %1227 = vmatprep.subr.mxu0 0.0
    %1228 = vmatpush2.msra.mxu0 0.0
    %1229 = vmatprep.subr.mxu0 0.0
    %1230 = vmatpush2.msra.mxu0 0.0
    %1231 = vmatprep.subr.mxu0 0.0
    %1232 = vmatpush2.msra.mxu0 0.0
    %1233 = vmatprep.subr.mxu0 0.0
    %1234 = vmatpush2.msra.mxu0 0.0
    %1235 = vmatprep.mubr.f32.mxu0 0.0
    %1236 = vmatmul.mubr.f32.gmra.mxu0 %v1167
    %v1237 = vpop.f32.mrf.mxu0
    %v1238 = vadd.f32 %v1163, %v1237
    %v1239 = vpop.f32.mrf.mxu0
    %1240 = vdwg.mxu0
    %v1241 = vld [vmem:[#allocation13] sm:$0xf]
    %v1242 = vld [vmem:[#allocation14] sm:$0xf]
    %v1243 = vld [vmem:[#allocation16] sm:$0xf]
    %v1244 = vld [vmem:[#allocation17] sm:$0xf]
    %v1245 = vld [vmem:[%s14] sm:$0xf]
    %v1246 = vld [vmem:[%s15] sm:$0xf]
    %v1247 = vld [vmem:[%s23] sm:$0xff]
    %v1248 = vld [vmem:[%s24] sm:$0xff]
    %v1249 = vld [vmem:[%s25] sm:$0x1f]
    %v1250 = vld [vmem:[%s26] sm:$0x1f]
    %vm1251 = vcmask 64512
    %v1253 = vsel %vm1251, %v1238, 0
    %1255 = vmatprep.subr.mxu0 0.0
    %1256 = vmatpush1.msra.mxu0 0.0
    %1257 = vmatprep.subr.mxu0 0.0
    %1258 = vmatpush1.msra.mxu0 0.0
    %1259 = vmatprep.subr.mxu0 0.0
    %1260 = vmatpush1.msra.mxu0 0.0
    %1261 = vmatprep.subr.mxu0 0.0
    %1262 = vmatpush1.msra.mxu0 0.0
    %1263 = vmatprep.subr.mxu0 0.0
    %1264 = vmatpush1.msra.mxu0 0.0
    %1265 = vmatprep.subr.mxu0 0.0
    %1266 = vmatpush1.msra.mxu0 0.0
    %1267 = vmatprep.subr.mxu0 0.0
    %1268 = vmatpush1.msra.mxu0 0.0
    %1269 = vmatprep.subr.mxu0 0.0
    %1270 = vmatpush1.msra.mxu0 0.0
    %1271 = vmatprep.subr.mxu0 0.0
    %1272 = vmatpush1.msra.mxu0 0.0
    %1273 = vmatprep.subr.mxu0 0.0
    %1274 = vmatpush1.msra.mxu0 0.0
    %1275 = vmatprep.subr.mxu0 0.0
    %1276 = vmatpush1.msra.mxu0 0.0
    %1277 = vmatprep.subr.mxu0 0.0
    %1278 = vmatpush1.msra.mxu0 0.0
    %1279 = vmatprep.subr.mxu0 0.0
    %1280 = vmatpush1.msra.mxu0 0.0
    %1281 = vmatprep.subr.mxu0 0.0
    %1282 = vmatpush1.msra.mxu0 0.0
    %1283 = vmatprep.subr.mxu0 0.0
    %1284 = vmatpush1.msra.mxu0 0.0
    %1285 = vmatprep.subr.mxu0 0.0
    %1286 = vmatpush1.msra.mxu0 %v1247
    %1287 = vmatprep.subr.mxu0 0.0
    %1288 = vmatpush2.msra.mxu0 0.0
    %1289 = vmatprep.subr.mxu0 0.0
    %1290 = vmatpush2.msra.mxu0 0.0
    %1291 = vmatprep.subr.mxu0 0.0
    %1292 = vmatpush2.msra.mxu0 0.0
    %1293 = vmatprep.subr.mxu0 0.0
    %1294 = vmatpush2.msra.mxu0 0.0
    %1295 = vmatprep.subr.mxu0 0.0
    %1296 = vmatpush2.msra.mxu0 0.0
    %1297 = vmatprep.subr.mxu0 0.0
    %1298 = vmatpush2.msra.mxu0 0.0
    %1299 = vmatprep.subr.mxu0 0.0
    %1300 = vmatpush2.msra.mxu0 0.0
    %1301 = vmatprep.subr.mxu0 0.0
    %1302 = vmatpush2.msra.mxu0 0.0
    %1303 = vmatprep.subr.mxu0 0.0
    %1304 = vmatpush2.msra.mxu0 0.0
    %1305 = vmatprep.subr.mxu0 0.0
    %1306 = vmatpush2.msra.mxu0 0.0
    %1307 = vmatprep.subr.mxu0 0.0
    %1308 = vmatpush2.msra.mxu0 0.0
    %1309 = vmatprep.subr.mxu0 0.0
    %1310 = vmatpush2.msra.mxu0 0.0
    %1311 = vmatprep.subr.mxu0 0.0
    %1312 = vmatpush2.msra.mxu0 0.0
    %1313 = vmatprep.subr.mxu0 0.0
    %1314 = vmatpush2.msra.mxu0 0.0
    %1315 = vmatprep.subr.mxu0 0.0
    %1316 = vmatpush2.msra.mxu0 0.0
    %1317 = vmatprep.subr.mxu0 0.0
    %1318 = vmatpush2.msra.mxu0 0.0
    %1319 = vmatprep.mubr.f32.mxu0 0.0
    %1320 = vmatmul.mubr.f32.gmra.mxu0 %v1253
    %v1321 = vpop.f32.mrf.mxu0
    %v1322 = vadd.f32 0.0, %v1321
    %v1323 = vpop.f32.mrf.mxu0
    %1324 = vdwg.mxu0
    %1325 = vmatprep.subr.mxu0 0.0
    %1326 = vmatpush1.msra.mxu0 0.0
    %1327 = vmatprep.subr.mxu0 0.0
    %1328 = vmatpush1.msra.mxu0 0.0
    %1329 = vmatprep.subr.mxu0 0.0
    %1330 = vmatpush1.msra.mxu0 0.0
    %1331 = vmatprep.subr.mxu0 0.0
    %1332 = vmatpush1.msra.mxu0 0.0
    %1333 = vmatprep.subr.mxu0 0.0
    %1334 = vmatpush1.msra.mxu0 0.0
    %1335 = vmatprep.subr.mxu0 0.0
    %1336 = vmatpush1.msra.mxu0 0.0
    %1337 = vmatprep.subr.mxu0 0.0
    %1338 = vmatpush1.msra.mxu0 0.0
    %1339 = vmatprep.subr.mxu0 0.0
    %1340 = vmatpush1.msra.mxu0 0.0
    %1341 = vmatprep.subr.mxu0 0.0
    %1342 = vmatpush1.msra.mxu0 0.0
    %1343 = vmatprep.subr.mxu0 0.0
    %1344 = vmatpush1.msra.mxu0 0.0
    %1345 = vmatprep.subr.mxu0 0.0
    %1346 = vmatpush1.msra.mxu0 0.0
    %1347 = vmatprep.subr.mxu0 0.0
    %1348 = vmatpush1.msra.mxu0 0.0
    %1349 = vmatprep.subr.mxu0 0.0
    %1350 = vmatpush1.msra.mxu0 0.0
    %1351 = vmatprep.subr.mxu0 0.0
    %1352 = vmatpush1.msra.mxu0 0.0
    %1353 = vmatprep.subr.mxu0 0.0
    %1354 = vmatpush1.msra.mxu0 0.0
    %1355 = vmatprep.subr.mxu0 0.0
    %1356 = vmatpush1.msra.mxu0 %v1248
    %1357 = vmatprep.subr.mxu0 0.0
    %1358 = vmatpush2.msra.mxu0 0.0
    %1359 = vmatprep.subr.mxu0 0.0
    %1360 = vmatpush2.msra.mxu0 0.0
    %1361 = vmatprep.subr.mxu0 0.0
    %1362 = vmatpush2.msra.mxu0 0.0
    %1363 = vmatprep.subr.mxu0 0.0
    %1364 = vmatpush2.msra.mxu0 0.0
    %1365 = vmatprep.subr.mxu0 0.0
    %1366 = vmatpush2.msra.mxu0 0.0
    %1367 = vmatprep.subr.mxu0 0.0
    %1368 = vmatpush2.msra.mxu0 0.0
    %1369 = vmatprep.subr.mxu0 0.0
    %1370 = vmatpush2.msra.mxu0 0.0
    %1371 = vmatprep.subr.mxu0 0.0
    %1372 = vmatpush2.msra.mxu0 0.0
    %1373 = vmatprep.subr.mxu0 0.0
    %1374 = vmatpush2.msra.mxu0 0.0
    %1375 = vmatprep.subr.mxu0 0.0
    %1376 = vmatpush2.msra.mxu0 0.0
    %1377 = vmatprep.subr.mxu0 0.0
    %1378 = vmatpush2.msra.mxu0 0.0
    %1379 = vmatprep.subr.mxu0 0.0
    %1380 = vmatpush2.msra.mxu0 0.0
    %1381 = vmatprep.subr.mxu0 0.0
    %1382 = vmatpush2.msra.mxu0 0.0
    %1383 = vmatprep.subr.mxu0 0.0
    %1384 = vmatpush2.msra.mxu0 0.0
    %1385 = vmatprep.subr.mxu0 0.0
    %1386 = vmatpush2.msra.mxu0 0.0
    %1387 = vmatprep.subr.mxu0 0.0
    %1388 = vmatpush2.msra.mxu0 0.0
    %1389 = vmatprep.mubr.f32.mxu0 0.0
    %1390 = vmatmul.mubr.f32.gmra.mxu0 %v1253
    %v1391 = vpop.f32.mrf.mxu0
    %v1392 = vadd.f32 0.0, %v1391
    %v1393 = vpop.f32.mrf.mxu0
    %1394 = vdwg.mxu0
    %v1396 = vsel %vm232, %v1242, 0
    %v1399 = vsel %vm239, %v1392, 0
    %1401 = vmatprep.subr.mxu0 0.0
    %1402 = vmatpush1.msra.mxu0 0.0
    %1403 = vmatprep.subr.mxu0 0.0
    %1404 = vmatpush1.msra.mxu0 0.0
    %1405 = vmatprep.subr.mxu0 0.0
    %1406 = vmatpush1.msra.mxu0 0.0
    %1407 = vmatprep.subr.mxu0 0.0
    %1408 = vmatpush1.msra.mxu0 0.0
    %1409 = vmatprep.subr.mxu0 0.0
    %1410 = vmatpush1.msra.mxu0 0.0
    %1411 = vmatprep.subr.mxu0 0.0
    %1412 = vmatpush1.msra.mxu0 0.0
    %1413 = vmatprep.subr.mxu0 0.0
    %1414 = vmatpush1.msra.mxu0 0.0
    %1415 = vmatprep.subr.mxu0 0.0
    %1416 = vmatpush1.msra.mxu0 0.0
    %1417 = vmatprep.subr.mxu0 0.0
    %1418 = vmatpush1.msra.mxu0 0.0
    %1419 = vmatprep.subr.mxu0 0.0
    %1420 = vmatpush1.msra.mxu0 0.0
    %1421 = vmatprep.subr.mxu0 0.0
    %1422 = vmatpush1.msra.mxu0 0.0
    %1423 = vmatprep.subr.mxu0 0.0
    %1424 = vmatpush1.msra.mxu0 0.0
    %1425 = vmatprep.subr.mxu0 0.0
    %1426 = vmatpush1.msra.mxu0 0.0
    %1427 = vmatprep.subr.mxu0 0.0
    %1428 = vmatpush1.msra.mxu0 0.0
    %1429 = vmatprep.subr.mxu0 0.0
    %1430 = vmatpush1.msra.mxu0 0.0
    %1431 = vmatprep.subr.mxu0 0.0
    %1432 = vmatpush1.msra.mxu0 %v1399
    %1433 = vmatprep.subr.mxu0 0.0
    %1434 = vmatpush2.msra.mxu0 0.0
    %1435 = vmatprep.subr.mxu0 0.0
    %1436 = vmatpush2.msra.mxu0 0.0
    %1437 = vmatprep.subr.mxu0 0.0
    %1438 = vmatpush2.msra.mxu0 0.0
    %1439 = vmatprep.subr.mxu0 0.0
    %1440 = vmatpush2.msra.mxu0 0.0
    %1441 = vmatprep.subr.mxu0 0.0
    %1442 = vmatpush2.msra.mxu0 0.0
    %1443 = vmatprep.subr.mxu0 0.0
    %1444 = vmatpush2.msra.mxu0 0.0
    %1445 = vmatprep.subr.mxu0 0.0
    %1446 = vmatpush2.msra.mxu0 0.0
    %1447 = vmatprep.subr.mxu0 0.0
    %1448 = vmatpush2.msra.mxu0 0.0
    %1449 = vmatprep.subr.mxu0 0.0
    %1450 = vmatpush2.msra.mxu0 0.0
    %1451 = vmatprep.subr.mxu0 0.0
    %1452 = vmatpush2.msra.mxu0 0.0
    %1453 = vmatprep.subr.mxu0 0.0
    %1454 = vmatpush2.msra.mxu0 0.0
    %1455 = vmatprep.subr.mxu0 0.0
    %1456 = vmatpush2.msra.mxu0 0.0
    %1457 = vmatprep.subr.mxu0 0.0
    %1458 = vmatpush2.msra.mxu0 0.0
    %1459 = vmatprep.subr.mxu0 0.0
    %1460 = vmatpush2.msra.mxu0 0.0
    %1461 = vmatprep.subr.mxu0 0.0
    %1462 = vmatpush2.msra.mxu0 0.0
    %1463 = vmatprep.subr.mxu0 0.0
    %1464 = vmatpush2.msra.mxu0 0.0
    %1465 = vmatprep.mubr.f32.mxu0 0.0
    %1466 = vmatmul.mubr.f32.gmra.mxu0 %v1396
    %v1467 = vpop.f32.mrf.mxu0
    %v1468 = vadd.f32 0.0, %v1467
    %v1469 = vpop.f32.mrf.mxu0
    %1470 = vdwg.mxu0
    %v1472 = vsel %vm232, %v1241, 0
    %v1475 = vsel %vm239, %v1322, 0
    %1477 = vmatprep.subr.mxu0 0.0
    %1478 = vmatpush1.msra.mxu0 0.0
    %1479 = vmatprep.subr.mxu0 0.0
    %1480 = vmatpush1.msra.mxu0 0.0
    %1481 = vmatprep.subr.mxu0 0.0
    %1482 = vmatpush1.msra.mxu0 0.0
    %1483 = vmatprep.subr.mxu0 0.0
    %1484 = vmatpush1.msra.mxu0 0.0
    %1485 = vmatprep.subr.mxu0 0.0
    %1486 = vmatpush1.msra.mxu0 0.0
    %1487 = vmatprep.subr.mxu0 0.0
    %1488 = vmatpush1.msra.mxu0 0.0
    %1489 = vmatprep.subr.mxu0 0.0
    %1490 = vmatpush1.msra.mxu0 0.0
    %1491 = vmatprep.subr.mxu0 0.0
    %1492 = vmatpush1.msra.mxu0 0.0
    %1493 = vmatprep.subr.mxu0 0.0
    %1494 = vmatpush1.msra.mxu0 0.0
    %1495 = vmatprep.subr.mxu0 0.0
    %1496 = vmatpush1.msra.mxu0 0.0
    %1497 = vmatprep.subr.mxu0 0.0
    %1498 = vmatpush1.msra.mxu0 0.0
    %1499 = vmatprep.subr.mxu0 0.0
    %1500 = vmatpush1.msra.mxu0 0.0
    %1501 = vmatprep.subr.mxu0 0.0
    %1502 = vmatpush1.msra.mxu0 0.0
    %1503 = vmatprep.subr.mxu0 0.0
    %1504 = vmatpush1.msra.mxu0 0.0
    %1505 = vmatprep.subr.mxu0 0.0
    %1506 = vmatpush1.msra.mxu0 0.0
    %1507 = vmatprep.subr.mxu0 0.0
    %1508 = vmatpush1.msra.mxu0 %v1475
    %1509 = vmatprep.subr.mxu0 0.0
    %1510 = vmatpush2.msra.mxu0 0.0
    %1511 = vmatprep.subr.mxu0 0.0
    %1512 = vmatpush2.msra.mxu0 0.0
    %1513 = vmatprep.subr.mxu0 0.0
    %1514 = vmatpush2.msra.mxu0 0.0
    %1515 = vmatprep.subr.mxu0 0.0
    %1516 = vmatpush2.msra.mxu0 0.0
    %1517 = vmatprep.subr.mxu0 0.0
    %1518 = vmatpush2.msra.mxu0 0.0
    %1519 = vmatprep.subr.mxu0 0.0
    %1520 = vmatpush2.msra.mxu0 0.0
    %1521 = vmatprep.subr.mxu0 0.0
    %1522 = vmatpush2.msra.mxu0 0.0
    %1523 = vmatprep.subr.mxu0 0.0
    %1524 = vmatpush2.msra.mxu0 0.0
    %1525 = vmatprep.subr.mxu0 0.0
    %1526 = vmatpush2.msra.mxu0 0.0
    %1527 = vmatprep.subr.mxu0 0.0
    %1528 = vmatpush2.msra.mxu0 0.0
    %1529 = vmatprep.subr.mxu0 0.0
    %1530 = vmatpush2.msra.mxu0 0.0
    %1531 = vmatprep.subr.mxu0 0.0
    %1532 = vmatpush2.msra.mxu0 0.0
    %1533 = vmatprep.subr.mxu0 0.0
    %1534 = vmatpush2.msra.mxu0 0.0
    %1535 = vmatprep.subr.mxu0 0.0
    %1536 = vmatpush2.msra.mxu0 0.0
    %1537 = vmatprep.subr.mxu0 0.0
    %1538 = vmatpush2.msra.mxu0 0.0
    %1539 = vmatprep.subr.mxu0 0.0
    %1540 = vmatpush2.msra.mxu0 0.0
    %1541 = vmatprep.mubr.f32.mxu0 0.0
    %1542 = vmatmul.mubr.f32.gmra.mxu0 %v1472
    %v1543 = vpop.f32.mrf.mxu0
    %v1544 = vadd.f32 %v1468, %v1543
    %v1545 = vpop.f32.mrf.mxu0
    %1546 = vdwg.mxu0
    %1548 = vset.pattern.permute.xlu0 0
    %1549 = vperm.xlu0 %1548, %v1245
    %v1550 = vpop.permute.xlu0 %1549
    %v1552 = vadd.f32 %v1544, %v1550
    %v1554 = vsel %vm232, %v1244, 0
    %1556 = vmatprep.subr.mxu0 0.0
    %1557 = vmatpush1.msra.mxu0 0.0
    %1558 = vmatprep.subr.mxu0 0.0
    %1559 = vmatpush1.msra.mxu0 0.0
    %1560 = vmatprep.subr.mxu0 0.0
    %1561 = vmatpush1.msra.mxu0 0.0
    %1562 = vmatprep.subr.mxu0 0.0
    %1563 = vmatpush1.msra.mxu0 0.0
    %1564 = vmatprep.subr.mxu0 0.0
    %1565 = vmatpush1.msra.mxu0 0.0
    %1566 = vmatprep.subr.mxu0 0.0
    %1567 = vmatpush1.msra.mxu0 0.0
    %1568 = vmatprep.subr.mxu0 0.0
    %1569 = vmatpush1.msra.mxu0 0.0
    %1570 = vmatprep.subr.mxu0 0.0
    %1571 = vmatpush1.msra.mxu0 0.0
    %1572 = vmatprep.subr.mxu0 0.0
    %1573 = vmatpush1.msra.mxu0 0.0
    %1574 = vmatprep.subr.mxu0 0.0
    %1575 = vmatpush1.msra.mxu0 0.0
    %1576 = vmatprep.subr.mxu0 0.0
    %1577 = vmatpush1.msra.mxu0 0.0
    %1578 = vmatprep.subr.mxu0 0.0
    %1579 = vmatpush1.msra.mxu0 0.0
    %1580 = vmatprep.subr.mxu0 0.0
    %1581 = vmatpush1.msra.mxu0 0.0
    %1582 = vmatprep.subr.mxu0 0.0
    %1583 = vmatpush1.msra.mxu0 0.0
    %1584 = vmatprep.subr.mxu0 0.0
    %1585 = vmatpush1.msra.mxu0 0.0
    %1586 = vmatprep.subr.mxu0 0.0
    %1587 = vmatpush1.msra.mxu0 %v1399
    %1588 = vmatprep.subr.mxu0 0.0
    %1589 = vmatpush2.msra.mxu0 0.0
    %1590 = vmatprep.subr.mxu0 0.0
    %1591 = vmatpush2.msra.mxu0 0.0
    %1592 = vmatprep.subr.mxu0 0.0
    %1593 = vmatpush2.msra.mxu0 0.0
    %1594 = vmatprep.subr.mxu0 0.0
    %1595 = vmatpush2.msra.mxu0 0.0
    %1596 = vmatprep.subr.mxu0 0.0
    %1597 = vmatpush2.msra.mxu0 0.0
    %1598 = vmatprep.subr.mxu0 0.0
    %1599 = vmatpush2.msra.mxu0 0.0
    %1600 = vmatprep.subr.mxu0 0.0
    %1601 = vmatpush2.msra.mxu0 0.0
    %1602 = vmatprep.subr.mxu0 0.0
    %1603 = vmatpush2.msra.mxu0 0.0
    %1604 = vmatprep.subr.mxu0 0.0
    %1605 = vmatpush2.msra.mxu0 0.0
    %1606 = vmatprep.subr.mxu0 0.0
    %1607 = vmatpush2.msra.mxu0 0.0
    %1608 = vmatprep.subr.mxu0 0.0
    %1609 = vmatpush2.msra.mxu0 0.0
    %1610 = vmatprep.subr.mxu0 0.0
    %1611 = vmatpush2.msra.mxu0 0.0
    %1612 = vmatprep.subr.mxu0 0.0
    %1613 = vmatpush2.msra.mxu0 0.0
    %1614 = vmatprep.subr.mxu0 0.0
    %1615 = vmatpush2.msra.mxu0 0.0
    %1616 = vmatprep.subr.mxu0 0.0
    %1617 = vmatpush2.msra.mxu0 0.0
    %1618 = vmatprep.subr.mxu0 0.0
    %1619 = vmatpush2.msra.mxu0 0.0
    %1620 = vmatprep.mubr.f32.mxu0 0.0
    %1621 = vmatmul.mubr.f32.gmra.mxu0 %v1554
    %v1622 = vpop.f32.mrf.mxu0
    %v1623 = vadd.f32 0.0, %v1622
    %v1624 = vpop.f32.mrf.mxu0
    %1625 = vdwg.mxu0
    %v1627 = vsel %vm232, %v1243, 0
    %1629 = vmatprep.subr.mxu0 0.0
    %1630 = vmatpush1.msra.mxu0 0.0
    %1631 = vmatprep.subr.mxu0 0.0
    %1632 = vmatpush1.msra.mxu0 0.0
    %1633 = vmatprep.subr.mxu0 0.0
    %1634 = vmatpush1.msra.mxu0 0.0
    %1635 = vmatprep.subr.mxu0 0.0
    %1636 = vmatpush1.msra.mxu0 0.0
    %1637 = vmatprep.subr.mxu0 0.0
    %1638 = vmatpush1.msra.mxu0 0.0
    %1639 = vmatprep.subr.mxu0 0.0
    %1640 = vmatpush1.msra.mxu0 0.0
    %1641 = vmatprep.subr.mxu0 0.0
    %1642 = vmatpush1.msra.mxu0 0.0
    %1643 = vmatprep.subr.mxu0 0.0
    %1644 = vmatpush1.msra.mxu0 0.0
    %1645 = vmatprep.subr.mxu0 0.0
    %1646 = vmatpush1.msra.mxu0 0.0
    %1647 = vmatprep.subr.mxu0 0.0
    %1648 = vmatpush1.msra.mxu0 0.0
    %1649 = vmatprep.subr.mxu0 0.0
    %1650 = vmatpush1.msra.mxu0 0.0
    %1651 = vmatprep.subr.mxu0 0.0
    %1652 = vmatpush1.msra.mxu0 0.0
    %1653 = vmatprep.subr.mxu0 0.0
    %1654 = vmatpush1.msra.mxu0 0.0
    %1655 = vmatprep.subr.mxu0 0.0
    %1656 = vmatpush1.msra.mxu0 0.0
    %1657 = vmatprep.subr.mxu0 0.0
    %1658 = vmatpush1.msra.mxu0 0.0
    %1659 = vmatprep.subr.mxu0 0.0
    %1660 = vmatpush1.msra.mxu0 %v1475
    %1661 = vmatprep.subr.mxu0 0.0
    %1662 = vmatpush2.msra.mxu0 0.0
    %1663 = vmatprep.subr.mxu0 0.0
    %1664 = vmatpush2.msra.mxu0 0.0
    %1665 = vmatprep.subr.mxu0 0.0
    %1666 = vmatpush2.msra.mxu0 0.0
    %1667 = vmatprep.subr.mxu0 0.0
    %1668 = vmatpush2.msra.mxu0 0.0
    %1669 = vmatprep.subr.mxu0 0.0
    %1670 = vmatpush2.msra.mxu0 0.0
    %1671 = vmatprep.subr.mxu0 0.0
    %1672 = vmatpush2.msra.mxu0 0.0
    %1673 = vmatprep.subr.mxu0 0.0
    %1674 = vmatpush2.msra.mxu0 0.0
    %1675 = vmatprep.subr.mxu0 0.0
    %1676 = vmatpush2.msra.mxu0 0.0
    %1677 = vmatprep.subr.mxu0 0.0
    %1678 = vmatpush2.msra.mxu0 0.0
    %1679 = vmatprep.subr.mxu0 0.0
    %1680 = vmatpush2.msra.mxu0 0.0
    %1681 = vmatprep.subr.mxu0 0.0
    %1682 = vmatpush2.msra.mxu0 0.0
    %1683 = vmatprep.subr.mxu0 0.0
    %1684 = vmatpush2.msra.mxu0 0.0
    %1685 = vmatprep.subr.mxu0 0.0
    %1686 = vmatpush2.msra.mxu0 0.0
    %1687 = vmatprep.subr.mxu0 0.0
    %1688 = vmatpush2.msra.mxu0 0.0
    %1689 = vmatprep.subr.mxu0 0.0
    %1690 = vmatpush2.msra.mxu0 0.0
    %1691 = vmatprep.subr.mxu0 0.0
    %1692 = vmatpush2.msra.mxu0 0.0
    %1693 = vmatprep.mubr.f32.mxu0 0.0
    %1694 = vmatmul.mubr.f32.gmra.mxu0 %v1627
    %v1695 = vpop.f32.mrf.mxu0
    %v1696 = vadd.f32 %v1623, %v1695
    %v1697 = vpop.f32.mrf.mxu0
    %1698 = vdwg.mxu0
    %1700 = vset.pattern.permute.xlu0 0
    %1701 = vperm.xlu0 %1700, %v1246
    %v1702 = vpop.permute.xlu0 %1701
    %v1704 = vadd.f32 %v1696, %v1702
    %vm1705 = vcmask 35840
    %v1706 = vsel %vm1705, %v1552, 0.0
    %1707 = vadd.xlane.f32.xlu0 %v1706
    %v1708 = vpop.xlane.xlu0 %1707
    %v1709 = vrcp.pop 5.0
    %v1710 = vmul.f32 %v1708, %v1709
    %v1711 = vsub.f32 %v1552, %v1710
    %v1712 = vmul.f32 %v1711, %v1711
    %v1713 = vsel %vm1705, %v1712, 0.0
    %1714 = vadd.xlane.f32.xlu0 %v1713
    %v1715 = vpop.xlane.xlu0 %1714
    %v1716 = vmul.f32 %v1715, %v1709
    %v1717 = vadd.f32 %v1716, 1e-05
    %v1718 = vrsqrt.pop %v1717
    %v1719 = vmul.f32 %v1711, %v1718
    %v1720 = vmul.f32 %v1719, 0.5
    %v1721 = vmul.f32 %v1719, 0.70710677
    %v1722 = verf.f32.pop %v1721
    %v1723 = vadd.f32 %v1722, 1.0
    %v1724 = vmul.f32 %v1720, %v1723
    %v1725 = vsel %vm1705, %v1704, 0.0
    %1726 = vadd.xlane.f32.xlu0 %v1725
    %v1727 = vpop.xlane.xlu0 %1726
    %v1728 = vmul.f32 %v1727, %v1709
    %v1729 = vsub.f32 %v1704, %v1728
    %v1730 = vmul.f32 %v1729, %v1729
    %v1731 = vsel %vm1705, %v1730, 0.0
    %1732 = vadd.xlane.f32.xlu0 %v1731
    %v1733 = vpop.xlane.xlu0 %1732
    %v1734 = vmul.f32 %v1733, %v1709
    %v1735 = vadd.f32 %v1734, 1e-05
    %v1736 = vrsqrt.pop %v1735
    %v1737 = vmul.f32 %v1729, %v1736
    %v1738 = vmul.f32 %v1737, 0.5
    %v1739 = vmul.f32 %v1737, 0.70710677
    %v1740 = verf.f32.pop %v1739
    %v1741 = vadd.f32 %v1740, 1.0
    %v1742 = vmul.f32 %v1738, %v1741
    %vm1743 = vcmask 39936
    %v1745 = vsel %vm1743, %v1742, 0
    %vm1747 = vcmask 1044480
    %v1749 = vsel %vm1747, %v1250, 0
    %1751 = vmatprep.subr.mxu0 0.0
    %1752 = vmatpush1.msra.mxu0 0.0
    %1753 = vmatprep.subr.mxu0 0.0
    %1754 = vmatpush1.msra.mxu0 0.0
    %1755 = vmatprep.subr.mxu0 0.0
    %1756 = vmatpush1.msra.mxu0 0.0
    %1757 = vmatprep.subr.mxu0 0.0
    %1758 = vmatpush1.msra.mxu0 0.0
    %1759 = vmatprep.subr.mxu0 0.0
    %1760 = vmatpush1.msra.mxu0 0.0
    %1761 = vmatprep.subr.mxu0 0.0
    %1762 = vmatpush1.msra.mxu0 0.0
    %1763 = vmatprep.subr.mxu0 0.0
    %1764 = vmatpush1.msra.mxu0 0.0
    %1765 = vmatprep.subr.mxu0 0.0
    %1766 = vmatpush1.msra.mxu0 0.0
    %1767 = vmatprep.subr.mxu0 0.0
    %1768 = vmatpush1.msra.mxu0 0.0
    %1769 = vmatprep.subr.mxu0 0.0
    %1770 = vmatpush1.msra.mxu0 0.0
    %1771 = vmatprep.subr.mxu0 0.0
    %1772 = vmatpush1.msra.mxu0 0.0
    %1773 = vmatprep.subr.mxu0 0.0
    %1774 = vmatpush1.msra.mxu0 0.0
    %1775 = vmatprep.subr.mxu0 0.0
    %1776 = vmatpush1.msra.mxu0 0.0
    %1777 = vmatprep.subr.mxu0 0.0
    %1778 = vmatpush1.msra.mxu0 0.0
    %1779 = vmatprep.subr.mxu0 0.0
    %1780 = vmatpush1.msra.mxu0 0.0
    %1781 = vmatprep.subr.mxu0 0.0
    %1782 = vmatpush1.msra.mxu0 %v1749
    %1783 = vmatprep.subr.mxu0 0.0
    %1784 = vmatpush2.msra.mxu0 0.0
    %1785 = vmatprep.subr.mxu0 0.0
    %1786 = vmatpush2.msra.mxu0 0.0
    %1787 = vmatprep.subr.mxu0 0.0
    %1788 = vmatpush2.msra.mxu0 0.0
    %1789 = vmatprep.subr.mxu0 0.0
    %1790 = vmatpush2.msra.mxu0 0.0
    %1791 = vmatprep.subr.mxu0 0.0
    %1792 = vmatpush2.msra.mxu0 0.0
    %1793 = vmatprep.subr.mxu0 0.0
    %1794 = vmatpush2.msra.mxu0 0.0
    %1795 = vmatprep.subr.mxu0 0.0
    %1796 = vmatpush2.msra.mxu0 0.0
    %1797 = vmatprep.subr.mxu0 0.0
    %1798 = vmatpush2.msra.mxu0 0.0
    %1799 = vmatprep.subr.mxu0 0.0
    %1800 = vmatpush2.msra.mxu0 0.0
    %1801 = vmatprep.subr.mxu0 0.0
    %1802 = vmatpush2.msra.mxu0 0.0
    %1803 = vmatprep.subr.mxu0 0.0
    %1804 = vmatpush2.msra.mxu0 0.0
    %1805 = vmatprep.subr.mxu0 0.0
    %1806 = vmatpush2.msra.mxu0 0.0
    %1807 = vmatprep.subr.mxu0 0.0
    %1808 = vmatpush2.msra.mxu0 0.0
    %1809 = vmatprep.subr.mxu0 0.0
    %1810 = vmatpush2.msra.mxu0 0.0
    %1811 = vmatprep.subr.mxu0 0.0
    %1812 = vmatpush2.msra.mxu0 0.0
    %1813 = vmatprep.subr.mxu0 0.0
    %1814 = vmatpush2.msra.mxu0 0.0
    %1815 = vmatprep.mubr.f32.mxu0 0.0
    %1816 = vmatmul.mubr.f32.gmra.mxu0 %v1745
    %v1817 = vpop.f32.mrf.mxu0
    %v1818 = vadd.f32 0.0, %v1817
    %v1819 = vpop.f32.mrf.mxu0
    %1820 = vdwg.mxu0
    %v1822 = vsel %vm1743, %v1724, 0
    %v1825 = vsel %vm1747, %v1249, 0
    %1827 = vmatprep.subr.mxu0 0.0
    %1828 = vmatpush1.msra.mxu0 0.0
    %1829 = vmatprep.subr.mxu0 0.0
    %1830 = vmatpush1.msra.mxu0 0.0
    %1831 = vmatprep.subr.mxu0 0.0
    %1832 = vmatpush1.msra.mxu0 0.0
    %1833 = vmatprep.subr.mxu0 0.0
    %1834 = vmatpush1.msra.mxu0 0.0
    %1835 = vmatprep.subr.mxu0 0.0
    %1836 = vmatpush1.msra.mxu0 0.0
    %1837 = vmatprep.subr.mxu0 0.0
    %1838 = vmatpush1.msra.mxu0 0.0
    %1839 = vmatprep.subr.mxu0 0.0
    %1840 = vmatpush1.msra.mxu0 0.0
    %1841 = vmatprep.subr.mxu0 0.0
    %1842 = vmatpush1.msra.mxu0 0.0
    %1843 = vmatprep.subr.mxu0 0.0
    %1844 = vmatpush1.msra.mxu0 0.0
    %1845 = vmatprep.subr.mxu0 0.0
    %1846 = vmatpush1.msra.mxu0 0.0
    %1847 = vmatprep.subr.mxu0 0.0
    %1848 = vmatpush1.msra.mxu0 0.0
    %1849 = vmatprep.subr.mxu0 0.0
    %1850 = vmatpush1.msra.mxu0 0.0
    %1851 = vmatprep.subr.mxu0 0.0
    %1852 = vmatpush1.msra.mxu0 0.0
    %1853 = vmatprep.subr.mxu0 0.0
    %1854 = vmatpush1.msra.mxu0 0.0
    %1855 = vmatprep.subr.mxu0 0.0
    %1856 = vmatpush1.msra.mxu0 0.0
    %1857 = vmatprep.subr.mxu0 0.0
    %1858 = vmatpush1.msra.mxu0 %v1825
    %1859 = vmatprep.subr.mxu0 0.0
    %1860 = vmatpush2.msra.mxu0 0.0
    %1861 = vmatprep.subr.mxu0 0.0
    %1862 = vmatpush2.msra.mxu0 0.0
    %1863 = vmatprep.subr.mxu0 0.0
    %1864 = vmatpush2.msra.mxu0 0.0
    %1865 = vmatprep.subr.mxu0 0.0
    %1866 = vmatpush2.msra.mxu0 0.0
    %1867 = vmatprep.subr.mxu0 0.0
    %1868 = vmatpush2.msra.mxu0 0.0
    %1869 = vmatprep.subr.mxu0 0.0
    %1870 = vmatpush2.msra.mxu0 0.0
    %1871 = vmatprep.subr.mxu0 0.0
    %1872 = vmatpush2.msra.mxu0 0.0
    %1873 = vmatprep.subr.mxu0 0.0
    %1874 = vmatpush2.msra.mxu0 0.0
    %1875 = vmatprep.subr.mxu0 0.0
    %1876 = vmatpush2.msra.mxu0 0.0
    %1877 = vmatprep.subr.mxu0 0.0
    %1878 = vmatpush2.msra.mxu0 0.0
    %1879 = vmatprep.subr.mxu0 0.0
    %1880 = vmatpush2.msra.mxu0 0.0
    %1881 = vmatprep.subr.mxu0 0.0
    %1882 = vmatpush2.msra.mxu0 0.0
    %1883 = vmatprep.subr.mxu0 0.0
    %1884 = vmatpush2.msra.mxu0 0.0
    %1885 = vmatprep.subr.mxu0 0.0
    %1886 = vmatpush2.msra.mxu0 0.0
    %1887 = vmatprep.subr.mxu0 0.0
    %1888 = vmatpush2.msra.mxu0 0.0
    %1889 = vmatprep.subr.mxu0 0.0
    %1890 = vmatpush2.msra.mxu0 0.0
    %1891 = vmatprep.mubr.f32.mxu0 0.0
    %1892 = vmatmul.mubr.f32.gmra.mxu0 %v1822
    %v1893 = vpop.f32.mrf.mxu0
    %v1894 = vadd.f32 %v1818, %v1893
    %v1895 = vpop.f32.mrf.mxu0
    %1896 = vdwg.mxu0
    %v1897 = vld [vmem:[%s18] sm:$0xff]
    %v1898 = vadd.f32 %v427, %v1084
    %v1899 = vadd.f32 %v1898, %v1894
    %v1901 = vsel %vm232, %v1897, 0
    %v1904 = vsel %vm239, %v1899, 0
    %1906 = vmatprep.subr.mxu0 0.0
    %1907 = vmatpush1.msra.mxu0 0.0
    %1908 = vmatprep.subr.mxu0 0.0
    %1909 = vmatpush1.msra.mxu0 0.0
    %1910 = vmatprep.subr.mxu0 0.0
    %1911 = vmatpush1.msra.mxu0 0.0
    %1912 = vmatprep.subr.mxu0 0.0
    %1913 = vmatpush1.msra.mxu0 0.0
    %1914 = vmatprep.subr.mxu0 0.0
    %1915 = vmatpush1.msra.mxu0 0.0
    %1916 = vmatprep.subr.mxu0 0.0
    %1917 = vmatpush1.msra.mxu0 0.0
    %1918 = vmatprep.subr.mxu0 0.0
    %1919 = vmatpush1.msra.mxu0 0.0
    %1920 = vmatprep.subr.mxu0 0.0
    %1921 = vmatpush1.msra.mxu0 0.0
    %1922 = vmatprep.subr.mxu0 0.0
    %1923 = vmatpush1.msra.mxu0 0.0
    %1924 = vmatprep.subr.mxu0 0.0
    %1925 = vmatpush1.msra.mxu0 0.0
    %1926 = vmatprep.subr.mxu0 0.0
    %1927 = vmatpush1.msra.mxu0 0.0
    %1928 = vmatprep.subr.mxu0 0.0
    %1929 = vmatpush1.msra.mxu0 0.0
    %1930 = vmatprep.subr.mxu0 0.0
    %1931 = vmatpush1.msra.mxu0 0.0
    %1932 = vmatprep.subr.mxu0 0.0
    %1933 = vmatpush1.msra.mxu0 0.0
    %1934 = vmatprep.subr.mxu0 0.0
    %1935 = vmatpush1.msra.mxu0 0.0
    %1936 = vmatprep.subr.mxu0 0.0
    %1937 = vmatpush1.msra.mxu0 %v1904
    %1938 = vmatprep.subr.mxu0 0.0
    %1939 = vmatpush2.msra.mxu0 0.0
    %1940 = vmatprep.subr.mxu0 0.0
    %1941 = vmatpush2.msra.mxu0 0.0
    %1942 = vmatprep.subr.mxu0 0.0
    %1943 = vmatpush2.msra.mxu0 0.0
    %1944 = vmatprep.subr.mxu0 0.0
    %1945 = vmatpush2.msra.mxu0 0.0
    %1946 = vmatprep.subr.mxu0 0.0
    %1947 = vmatpush2.msra.mxu0 0.0
    %1948 = vmatprep.subr.mxu0 0.0
    %1949 = vmatpush2.msra.mxu0 0.0
    %1950 = vmatprep.subr.mxu0 0.0
    %1951 = vmatpush2.msra.mxu0 0.0
    %1952 = vmatprep.subr.mxu0 0.0
    %1953 = vmatpush2.msra.mxu0 0.0
    %1954 = vmatprep.subr.mxu0 0.0
    %1955 = vmatpush2.msra.mxu0 0.0
    %1956 = vmatprep.subr.mxu0 0.0
    %1957 = vmatpush2.msra.mxu0 0.0
    %1958 = vmatprep.subr.mxu0 0.0
    %1959 = vmatpush2.msra.mxu0 0.0
    %1960 = vmatprep.subr.mxu0 0.0
    %1961 = vmatpush2.msra.mxu0 0.0
    %1962 = vmatprep.subr.mxu0 0.0
    %1963 = vmatpush2.msra.mxu0 0.0
    %1964 = vmatprep.subr.mxu0 0.0
    %1965 = vmatpush2.msra.mxu0 0.0
    %1966 = vmatprep.subr.mxu0 0.0
    %1967 = vmatpush2.msra.mxu0 0.0
    %1968 = vmatprep.subr.mxu0 0.0
    %1969 = vmatpush2.msra.mxu0 0.0
    %1970 = vmatprep.mubr.f32.mxu0 0.0
    %1971 = vmatmul.mubr.f32.gmra.mxu0 %v1901
    %v1972 = vpop.f32.mrf.mxu0
    %v1973 = vadd.f32 0.0, %v1972
    %v1974 = vpop.f32.mrf.mxu0
    %1975 = vdwg.mxu0
    %v1976 = vadd.f32 %v315, %v1973
    %1977 = vst.msk [vmem:[#allocation23] sm:$0xff] %vm406, %v1976
    // Predicated region
    $region158: #{tpu_custom_call.1} parent=1 // pred_check
      _
    $region159: #{tpu_custom_call.1} parent=1 // pred_check_branch
      %1979 = sbr.rel (0) target = $region161
    $region160: #{tpu_custom_call.1} parent=1 // pred_region
      %s1981 = ssub.s32 128, 128
      %1982 = vsyncadd [#allocation4], %s1981
      %s1984 = sshll.u32 [#allocation22], 4
      %s1985 = int_to_ptr.vmem [resolvable:$true] %s1984
      %1987 = dma.vmem_to_hbm [thread:$0]  %s1985, 128, %s27, [#allocation4]
    $region161: #{tpu_custom_call.1} parent=1 // pred_fallthru
      _
    // Predicated region
    $region162: #{tpu_custom_call.1} parent=1 // pred_check
      _
    $region163: #{tpu_custom_call.1} parent=1 // pred_check_branch
      %1989 = sbr.rel (0) target = $region165
    $region164: #{tpu_custom_call.1} parent=1 // pred_region
      %s1991 = ssub.s32 128, 128
      %1992 = vsyncadd [#allocation24], %s1991
      %s1994 = sshll.u32 [#allocation23], 4
      %s1995 = int_to_ptr.vmem [resolvable:$true] %s1994
      %1997 = dma.vmem_to_hbm [thread:$0]  %s1995, 128, %s28, [#allocation24]
    $region165: #{tpu_custom_call.1} parent=1 // pred_fallthru
      _
    // Predicated region
    $region166: #{tpu_custom_call.1} parent=1 // pred_check
      _
    $region167: #{tpu_custom_call.1} parent=1 // pred_check_branch
      %1999 = sbr.rel (0) target = $region169
    $region168: #{tpu_custom_call.1} parent=1 // pred_region
      %2000 = dma.done [#allocation4], 128
    $region169: #{tpu_custom_call.1} parent=1 // pred_fallthru
      _
    // Predicated region
    $region170: #{tpu_custom_call.1} parent=1 // pred_check
      _
    $region171: #{tpu_custom_call.1} parent=1 // pred_check_branch
      %2002 = sbr.rel (0) target = $region173
    $region172: #{tpu_custom_call.1} parent=1 // pred_region
      %2003 = dma.done [#allocation24], 128
    $region173: #{tpu_custom_call.1} parent=1 // pred_fallthru
      _
    %2004 = vsyncpa [#allocation3], 1
    %2005 = vsyncpa [#allocation6], 1
    %2006 = vsyncpa [#allocation9], 1
    %2007 = vsyncpa [#allocation12], 1
    %2008 = vsyncpa [#allocation15], 1
    %2009 = vsyncpa [#allocation18], 1
    %2010 = vsyncpa [#allocation21], 1
    %2011 = vsyncpa [#allocation4], 1
    %2012 = vsyncpa [#allocation24], 1

</llo_original>
